<compile_context>
chip_gen: v5e
topology: v5e:2x2
jax: 0.10.0
libtpu: 0.0.40
codegen_flags: <defaults>
</compile_context>

<pallas_src>
import functools

import jax
import jax.numpy as jnp
from jax.experimental import pallas as pl
from jax.experimental.pallas import tpu as pltpu


def _simple_cnn_kernel(H, W, B,
                       x1col_ref, masks_ref, w1_ref, b1_ref, w2_ref, b2_ref,
                       w3t_ref, b3_ref, out_ref, patches_ref):
    HW = H * W
    npix = B * HW
    C1 = w1_ref.shape[0]

    # ---- conv1 (1 -> C1) + ReLU: one bf16 MXU matmul on the host im2col ----
    #   (C1, 9) @ (9, B*H*W) -> (C1, B*H*W), f32 accumulation
    h1 = jnp.dot(w1_ref[...], x1col_ref[...],
                 preferred_element_type=jnp.float32)
    h1 = jnp.maximum(h1 + b1_ref[...], 0.0)                       # (C1, npix) f32
    # Tap-construction dtype follows the masks: bf16 on v6e/v7x, f32 on v5e.
    h1 = h1.astype(masks_ref.dtype)

    # ---- conv2 im2col built in-register: XLU lane rotate + border mask, ----
    # ---- stored tap-by-tap into the bf16 patch scratch (9*C1, npix).    ----
    # For tap (ky, kx) the value needed at flat pixel l is h1[:, l + delta]
    # with delta = (ky-1)*W + (kx-1); out-of-image / cross-batch / wrapped
    # lanes are zeroed by the precomputed masks, so a circular rotate is exact
    # (requires npix % 128 == 0, asserted in the wrapper).
    for tap in range(9):
        oy, ox = tap // 3 - 1, tap % 3 - 1
        delta = oy * W + ox
        shifted = h1 if delta == 0 else pltpu.roll(
            h1, shift=(-delta) % npix, axis=1)
        masked = shifted * masks_ref[pl.ds(tap, 1), :]             # (C1, npix)
        patches_ref[pl.ds(tap * C1, C1), :] = masked.astype(patches_ref.dtype)

    # ---- conv2 (C1 -> C2) + ReLU: one fused K = 9*C1 bf16 matmul ----
    #   (C2, 9*C1) @ (9*C1, npix) -> (C2, npix), f32 accumulation
    h2 = jnp.dot(w2_ref[...], patches_ref[...],
                 preferred_element_type=jnp.float32)
    h2 = jnp.maximum(h2 + b2_ref[...], 0.0)                        # (C2, npix)

    # ---- classifier on the lane-dense activations, then AdaptiveAvgPool ----
    # ---- ((1,1)) as a per-batch lane reduction (sum over each HW block) ----
    t = jnp.dot(w3t_ref[...], h2, preferred_element_type=jnp.float32)  # (NC, npix)
    cols = [jnp.sum(t[:, b * HW:(b + 1) * HW], axis=1, keepdims=True)
            for b in range(B)]                                     # B x (NC, 1)
    pooled = jnp.concatenate(cols, axis=1) * (1.0 / HW)            # (NC, B)
    out_ref[...] = pooled + b3_ref[...]                            # (NC, B)


def _bf16_tap_math():
    """bf16 VALU math is native on v6e/v7x; v5e (and older) would emulate it."""
    try:
        kind = jax.devices()[0].device_kind.lower()
    except Exception:
        return False
    return ("v6" in kind) or ("v7" in kind)


@functools.partial(jax.jit, static_argnames=("tap_bf16",))
def _simple_cnn_forward_impl(x, params, tap_bf16):
    B, H, W = x.shape
    N = B * H * W
    assert N % 128 == 0, "roll+mask im2col requires B*H*W to be lane-aligned"
    C1 = params["w1"].shape[0]
    C2 = params["w2"].shape[0]
    NC = params["w3"].shape[0]
    tap_dtype = jnp.bfloat16 if tap_bf16 else jnp.float32

    # ---- host-side layout prep (pure data movement, no FLOPs) ----
    # conv1 im2col with lane index l = b*H*W + y*W + x, bf16 MXU operand.
    x_pad = jnp.pad(x, ((0, 0), (1, 1), (1, 1)))
    x1col = jnp.stack(
        [x_pad[:, ky:ky + H, kx:kx + W].reshape(N)
         for ky in range(3) for kx in range(3)], axis=0).astype(jnp.bfloat16)

    # per-tap validity masks for the in-kernel conv2 im2col (same geometry)
    yy = jnp.arange(H)[:, None]
    xx = jnp.arange(W)[None, :]
    masks = jnp.stack(
        [jnp.tile(((yy + ky - 1 >= 0) & (yy + ky - 1 < H) &
                   (xx + kx - 1 >= 0) & (xx + kx - 1 < W)
                   ).astype(jnp.float32).reshape(H * W), (B,))
         for ky in range(3) for kx in range(3)], axis=0).astype(tap_dtype)

    # weights in kernel layout (channels on sublanes), matmul operands in bf16
    w1 = params["w1"].reshape(C1, 9).astype(jnp.bfloat16)          # (C1, 9)
    b1 = params["b1"].reshape(C1, 1)                               # f32
    w2 = jnp.transpose(params["w2"], (0, 2, 3, 1)).reshape(C2, 9 * C1)
    w2 = w2.astype(jnp.bfloat16)                                   # (C2, 9*C1)
    b2 = params["b2"].reshape(C2, 1)                               # f32
    w3t = params["w3"]                                             # (NC, C2) f32
    b3 = params["b3"].reshape(NC, 1)                               # f32

    kernel = functools.partial(_simple_cnn_kernel, H, W, B)
    out_nb = pl.pallas_call(
        kernel,
        out_shape=jax.ShapeDtypeStruct((NC, B), jnp.float32),
        # Single invocation: the whole (tiny) problem fits comfortably in VMEM,
        # so all operands are mapped as full-array VMEM blocks and the weights
        # are fetched exactly once.
        in_specs=[pl.BlockSpec(memory_space=pltpu.MemorySpace.VMEM)] * 8,
        out_specs=pl.BlockSpec(memory_space=pltpu.MemorySpace.VMEM),
        scratch_shapes=[pltpu.VMEM((9 * C1, N), jnp.bfloat16)],    # patch slab
    )(x1col, masks, w1, b1, w2, b2, w3t, b3)
    return out_nb.T                                                # (B, NC)


def simple_cnn_forward(x, params):
    """x: (B, H, W) float32 (the module's forward unsqueezes the channel dim).
    params: PyTorch-convention weights. Returns logits (B, num_classes)."""
    return _simple_cnn_forward_impl(x, params, tap_bf16=_bf16_tap_math())


def make_params(key, num_classes=2):
    """Deterministic synthetic params in PyTorch-convention shapes."""
    ks = jax.random.split(key, 6)
    return {
        "w1": jax.random.normal(ks[0], (32, 1, 3, 3), jnp.float32) * 0.1,
        "b1": jax.random.normal(ks[1], (32,), jnp.float32) * 0.1,
        "w2": jax.random.normal(ks[2], (64, 32, 3, 3), jnp.float32) * 0.05,
        "b2": jax.random.normal(ks[3], (64,), jnp.float32) * 0.1,
        "w3": jax.random.normal(ks[4], (num_classes, 64), jnp.float32) * 0.1,
        "b3": jax.random.normal(ks[5], (num_classes,), jnp.float32) * 0.1,
    }


def reference_forward(x, params):
    """Pure-JAX reference mirroring the PyTorch forward (f32)."""
    dn = ("NCHW", "OIHW", "NCHW")
    xc = x[:, None, :, :]
    h1 = jax.lax.conv_general_dilated(
        xc, params["w1"], window_strides=(1, 1), padding="SAME",
        dimension_numbers=dn, precision=jax.lax.Precision.HIGHEST)
    h1 = jax.nn.relu(h1 + params["b1"][None, :, None, None])
    h2 = jax.lax.conv_general_dilated(
        h1, params["w2"], window_strides=(1, 1), padding="SAME",
        dimension_numbers=dn, precision=jax.lax.Precision.HIGHEST)
    h2 = jax.nn.relu(h2 + params["b2"][None, :, None, None])
    pooled = h2.mean(axis=(2, 3))                                  # (B, 64)
    return pooled @ params["w3"].T + params["b3"]


if __name__ == "__main__":
    key = jax.random.PRNGKey(0)
    k_x, k_p = jax.random.split(key)
    B, H, W = 2, 16, 16
    x = jax.random.normal(k_x, (B, H, W), jnp.float32)
    params = make_params(k_p, num_classes=2)

    logits = simple_cnn_forward(x, params)
    jax.block_until_ready(logits)

    ref = reference_forward(x, params)
    assert logits.shape == (B, 2)
    # bf16 conv operands with f32 accumulation -> relaxed tolerance.
    assert jnp.allclose(logits, ref, rtol=2e-2, atol=2e-2), (logits, ref)
    print("KERNEL_OK")
</pallas_src>

<mosaic_0001>
module attributes {stable_mosaic.version = 11 : i64} {
  func.func @_simple_cnn_kernel(%arg0: memref<9x512xbf16, #tpu.memory_space<vmem>>, %arg1: memref<9x512xf32, #tpu.memory_space<vmem>>, %arg2: memref<32x9xbf16, #tpu.memory_space<vmem>>, %arg3: memref<32x1xf32, #tpu.memory_space<vmem>>, %arg4: memref<64x288xbf16, #tpu.memory_space<vmem>>, %arg5: memref<64x1xf32, #tpu.memory_space<vmem>>, %arg6: memref<2x64xf32, #tpu.memory_space<vmem>>, %arg7: memref<2x1xf32, #tpu.memory_space<vmem>>, %arg8: memref<2x2xf32, #tpu.memory_space<vmem>>, %arg9: memref<288x512xbf16, #tpu.memory_space<vmem>>) attributes {dimension_semantics = [], scalar_prefetch = 0 : i64, scratch_operands = 1 : i64, tpu.core_type = #tpu.core_type<tc>} {
    %c0 = arith.constant 0 : index
    %c0_0 = arith.constant 0 : index
    %0 = vector.load %arg2[%c0, %c0_0] : memref<32x9xbf16, #tpu.memory_space<vmem>>, vector<32x9xbf16>
    %c0_1 = arith.constant 0 : index
    %c0_2 = arith.constant 0 : index
    %1 = vector.load %arg0[%c0_1, %c0_2] : memref<9x512xbf16, #tpu.memory_space<vmem>>, vector<9x512xbf16>
    %cst = arith.constant dense<0.000000e+00> : vector<32x512xf32>
    %2 = tpu.matmul %0, %1, %cst {dimension_numbers = #tpu.dot_dimension_numbers<[1], [0], [0], [1], [0, 0, 1, 1], [], []>} : vector<32x9xbf16>, vector<9x512xbf16>, vector<32x512xf32> -> vector<32x512xf32>
    %c0_3 = arith.constant 0 : index
    %c0_4 = arith.constant 0 : index
    %3 = vector.load %arg3[%c0_3, %c0_4] : memref<32x1xf32, #tpu.memory_space<vmem>>, vector<32x1xf32>
    %4 = vector.broadcast %3 : vector<32x1xf32> to vector<32x512xf32>
    %5 = arith.addf %2, %4 : vector<32x512xf32>
    %cst_5 = arith.constant 0.000000e+00 : f32
    %6 = vector.broadcast %cst_5 : f32 to vector<32x512xf32>
    %7 = arith.maximumf %5, %6 : vector<32x512xf32>
    %c17_i32 = arith.constant 17 : i32
    %8 = tpu.dynamic_rotate %7 by %c17_i32 dim 1 : vector<32x512xf32>, i32 -> vector<32x512xf32>
    %c0_6 = arith.constant 0 : index
    %c0_7 = arith.constant 0 : index
    %9 = vector.load %arg1[%c0_6, %c0_7] : memref<9x512xf32, #tpu.memory_space<vmem>>, vector<1x512xf32>
    %10 = vector.broadcast %9 : vector<1x512xf32> to vector<32x512xf32>
    %11 = arith.mulf %8, %10 : vector<32x512xf32>
    %12 = arith.truncf %11 : vector<32x512xf32> to vector<32x512xbf16>
    %c0_8 = arith.constant 0 : index
    %c0_9 = arith.constant 0 : index
    %13 = vector.load %arg9[%c0_8, %c0_9] : memref<288x512xbf16, #tpu.memory_space<vmem>>, vector<32x512xbf16>
    tpu.vector_store %arg9[%c0_8, %c0_9], %12 {strides = array<i32>} : memref<288x512xbf16, #tpu.memory_space<vmem>>, vector<32x512xbf16>,
    %c16_i32 = arith.constant 16 : i32
    %14 = tpu.dynamic_rotate %7 by %c16_i32 dim 1 : vector<32x512xf32>, i32 -> vector<32x512xf32>
    %c1 = arith.constant 1 : index
    %c0_10 = arith.constant 0 : index
    %15 = vector.load %arg1[%c1, %c0_10] : memref<9x512xf32, #tpu.memory_space<vmem>>, vector<1x512xf32>
    %16 = vector.broadcast %15 : vector<1x512xf32> to vector<32x512xf32>
    %17 = arith.mulf %14, %16 : vector<32x512xf32>
    %18 = arith.truncf %17 : vector<32x512xf32> to vector<32x512xbf16>
    %c32 = arith.constant 32 : index
    %c0_11 = arith.constant 0 : index
    %19 = vector.load %arg9[%c32, %c0_11] : memref<288x512xbf16, #tpu.memory_space<vmem>>, vector<32x512xbf16>
    tpu.vector_store %arg9[%c32, %c0_11], %18 {strides = array<i32>} : memref<288x512xbf16, #tpu.memory_space<vmem>>, vector<32x512xbf16>,
    %c15_i32 = arith.constant 15 : i32
    %20 = tpu.dynamic_rotate %7 by %c15_i32 dim 1 : vector<32x512xf32>, i32 -> vector<32x512xf32>
    %c2 = arith.constant 2 : index
    %c0_12 = arith.constant 0 : index
    %21 = vector.load %arg1[%c2, %c0_12] : memref<9x512xf32, #tpu.memory_space<vmem>>, vector<1x512xf32>
    %22 = vector.broadcast %21 : vector<1x512xf32> to vector<32x512xf32>
    %23 = arith.mulf %20, %22 : vector<32x512xf32>
    %24 = arith.truncf %23 : vector<32x512xf32> to vector<32x512xbf16>
    %c64 = arith.constant 64 : index
    %c0_13 = arith.constant 0 : index
    %25 = vector.load %arg9[%c64, %c0_13] : memref<288x512xbf16, #tpu.memory_space<vmem>>, vector<32x512xbf16>
    tpu.vector_store %arg9[%c64, %c0_13], %24 {strides = array<i32>} : memref<288x512xbf16, #tpu.memory_space<vmem>>, vector<32x512xbf16>,
    %c1_i32 = arith.constant 1 : i32
    %26 = tpu.dynamic_rotate %7 by %c1_i32 dim 1 : vector<32x512xf32>, i32 -> vector<32x512xf32>
    %c3 = arith.constant 3 : index
    %c0_14 = arith.constant 0 : index
    %27 = vector.load %arg1[%c3, %c0_14] : memref<9x512xf32, #tpu.memory_space<vmem>>, vector<1x512xf32>
    %28 = vector.broadcast %27 : vector<1x512xf32> to vector<32x512xf32>
    %29 = arith.mulf %26, %28 : vector<32x512xf32>
    %30 = arith.truncf %29 : vector<32x512xf32> to vector<32x512xbf16>
    %c96 = arith.constant 96 : index
    %c0_15 = arith.constant 0 : index
    %31 = vector.load %arg9[%c96, %c0_15] : memref<288x512xbf16, #tpu.memory_space<vmem>>, vector<32x512xbf16>
    tpu.vector_store %arg9[%c96, %c0_15], %30 {strides = array<i32>} : memref<288x512xbf16, #tpu.memory_space<vmem>>, vector<32x512xbf16>,
    %c4 = arith.constant 4 : index
    %c0_16 = arith.constant 0 : index
    %32 = vector.load %arg1[%c4, %c0_16] : memref<9x512xf32, #tpu.memory_space<vmem>>, vector<1x512xf32>
    %33 = vector.broadcast %32 : vector<1x512xf32> to vector<32x512xf32>
    %34 = arith.mulf %7, %33 : vector<32x512xf32>
    %35 = arith.truncf %34 : vector<32x512xf32> to vector<32x512xbf16>
    %c128 = arith.constant 128 : index
    %c0_17 = arith.constant 0 : index
    %36 = vector.load %arg9[%c128, %c0_17] : memref<288x512xbf16, #tpu.memory_space<vmem>>, vector<32x512xbf16>
    tpu.vector_store %arg9[%c128, %c0_17], %35 {strides = array<i32>} : memref<288x512xbf16, #tpu.memory_space<vmem>>, vector<32x512xbf16>,
    %c511_i32 = arith.constant 511 : i32
    %37 = tpu.dynamic_rotate %7 by %c511_i32 dim 1 : vector<32x512xf32>, i32 -> vector<32x512xf32>
    %c5 = arith.constant 5 : index
    %c0_18 = arith.constant 0 : index
    %38 = vector.load %arg1[%c5, %c0_18] : memref<9x512xf32, #tpu.memory_space<vmem>>, vector<1x512xf32>
    %39 = vector.broadcast %38 : vector<1x512xf32> to vector<32x512xf32>
    %40 = arith.mulf %37, %39 : vector<32x512xf32>
    %41 = arith.truncf %40 : vector<32x512xf32> to vector<32x512xbf16>
    %c160 = arith.constant 160 : index
    %c0_19 = arith.constant 0 : index
    %42 = vector.load %arg9[%c160, %c0_19] : memref<288x512xbf16, #tpu.memory_space<vmem>>, vector<32x512xbf16>
    tpu.vector_store %arg9[%c160, %c0_19], %41 {strides = array<i32>} : memref<288x512xbf16, #tpu.memory_space<vmem>>, vector<32x512xbf16>,
    %c497_i32 = arith.constant 497 : i32
    %43 = tpu.dynamic_rotate %7 by %c497_i32 dim 1 : vector<32x512xf32>, i32 -> vector<32x512xf32>
    %c6 = arith.constant 6 : index
    %c0_20 = arith.constant 0 : index
    %44 = vector.load %arg1[%c6, %c0_20] : memref<9x512xf32, #tpu.memory_space<vmem>>, vector<1x512xf32>
    %45 = vector.broadcast %44 : vector<1x512xf32> to vector<32x512xf32>
    %46 = arith.mulf %43, %45 : vector<32x512xf32>
    %47 = arith.truncf %46 : vector<32x512xf32> to vector<32x512xbf16>
    %c192 = arith.constant 192 : index
    %c0_21 = arith.constant 0 : index
    %48 = vector.load %arg9[%c192, %c0_21] : memref<288x512xbf16, #tpu.memory_space<vmem>>, vector<32x512xbf16>
    tpu.vector_store %arg9[%c192, %c0_21], %47 {strides = array<i32>} : memref<288x512xbf16, #tpu.memory_space<vmem>>, vector<32x512xbf16>,
    %c496_i32 = arith.constant 496 : i32
    %49 = tpu.dynamic_rotate %7 by %c496_i32 dim 1 : vector<32x512xf32>, i32 -> vector<32x512xf32>
    %c7 = arith.constant 7 : index
    %c0_22 = arith.constant 0 : index
    %50 = vector.load %arg1[%c7, %c0_22] : memref<9x512xf32, #tpu.memory_space<vmem>>, vector<1x512xf32>
    %51 = vector.broadcast %50 : vector<1x512xf32> to vector<32x512xf32>
    %52 = arith.mulf %49, %51 : vector<32x512xf32>
    %53 = arith.truncf %52 : vector<32x512xf32> to vector<32x512xbf16>
    %c224 = arith.constant 224 : index
    %c0_23 = arith.constant 0 : index
    %54 = vector.load %arg9[%c224, %c0_23] : memref<288x512xbf16, #tpu.memory_space<vmem>>, vector<32x512xbf16>
    tpu.vector_store %arg9[%c224, %c0_23], %53 {strides = array<i32>} : memref<288x512xbf16, #tpu.memory_space<vmem>>, vector<32x512xbf16>,
    %c495_i32 = arith.constant 495 : i32
    %55 = tpu.dynamic_rotate %7 by %c495_i32 dim 1 : vector<32x512xf32>, i32 -> vector<32x512xf32>
    %c8 = arith.constant 8 : index
    %c0_24 = arith.constant 0 : index
    %56 = vector.load %arg1[%c8, %c0_24] : memref<9x512xf32, #tpu.memory_space<vmem>>, vector<1x512xf32>
    %57 = vector.broadcast %56 : vector<1x512xf32> to vector<32x512xf32>
    %58 = arith.mulf %55, %57 : vector<32x512xf32>
    %59 = arith.truncf %58 : vector<32x512xf32> to vector<32x512xbf16>
    %c256 = arith.constant 256 : index
    %c0_25 = arith.constant 0 : index
    %60 = vector.load %arg9[%c256, %c0_25] : memref<288x512xbf16, #tpu.memory_space<vmem>>, vector<32x512xbf16>
    tpu.vector_store %arg9[%c256, %c0_25], %59 {strides = array<i32>} : memref<288x512xbf16, #tpu.memory_space<vmem>>, vector<32x512xbf16>,
    %c0_26 = arith.constant 0 : index
    %c0_27 = arith.constant 0 : index
    %61 = vector.load %arg4[%c0_26, %c0_27] : memref<64x288xbf16, #tpu.memory_space<vmem>>, vector<64x288xbf16>
    %c0_28 = arith.constant 0 : index
    %c0_29 = arith.constant 0 : index
    %62 = vector.load %arg9[%c0_28, %c0_29] : memref<288x512xbf16, #tpu.memory_space<vmem>>, vector<288x512xbf16>
    %cst_30 = arith.constant dense<0.000000e+00> : vector<64x512xf32>
    %63 = tpu.matmul %61, %62, %cst_30 {dimension_numbers = #tpu.dot_dimension_numbers<[1], [0], [0], [1], [0, 0, 1, 1], [], []>} : vector<64x288xbf16>, vector<288x512xbf16>, vector<64x512xf32> -> vector<64x512xf32>
    %c0_31 = arith.constant 0 : index
    %c0_32 = arith.constant 0 : index
    %64 = vector.load %arg5[%c0_31, %c0_32] : memref<64x1xf32, #tpu.memory_space<vmem>>, vector<64x1xf32>
    %65 = vector.broadcast %64 : vector<64x1xf32> to vector<64x512xf32>
    %66 = arith.addf %63, %65 : vector<64x512xf32>
    %cst_33 = arith.constant 0.000000e+00 : f32
    %67 = vector.broadcast %cst_33 : f32 to vector<64x512xf32>
    %68 = arith.maximumf %66, %67 : vector<64x512xf32>
    %c0_34 = arith.constant 0 : index
    %c0_35 = arith.constant 0 : index
    %69 = vector.load %arg6[%c0_34, %c0_35] : memref<2x64xf32, #tpu.memory_space<vmem>>, vector<2x64xf32>
    %cst_36 = arith.constant dense<0.000000e+00> : vector<2x512xf32>
    %70 = tpu.matmul %69, %68, %cst_36 {dimension_numbers = #tpu.dot_dimension_numbers<[1], [0], [0], [1], [0, 0, 1, 1], [], []>} : vector<2x64xf32>, vector<64x512xf32>, vector<2x512xf32> -> vector<2x512xf32>
    %71 = vector.extract_strided_slice %70 {offsets = [0, 0], sizes = [2, 256], strides = [1, 1]} : vector<2x512xf32> to vector<2x256xf32>
    %cst_37 = arith.constant dense<0.000000e+00> : vector<2xf32>
    %72 = vector.multi_reduction <add>, %71, %cst_37 [1] : vector<2x256xf32> to vector<2xf32>
    %73 = vector.shape_cast %72 : vector<2xf32> to vector<2x1xf32>
    %74 = vector.extract_strided_slice %70 {offsets = [0, 256], sizes = [2, 256], strides = [1, 1]} : vector<2x512xf32> to vector<2x256xf32>
    %cst_38 = arith.constant dense<0.000000e+00> : vector<2xf32>
    %75 = vector.multi_reduction <add>, %74, %cst_38 [1] : vector<2x256xf32> to vector<2xf32>
    %76 = vector.shape_cast %75 : vector<2xf32> to vector<2x1xf32>
    %77 = tpu.concatenate %73, %76 in 1 : vector<2x1xf32>, vector<2x1xf32> -> vector<2x2xf32>
    %cst_39 = arith.constant 3.906250e-03 : f32
    %78 = vector.broadcast %cst_39 : f32 to vector<2x2xf32>
    %79 = arith.mulf %77, %78 : vector<2x2xf32>
    %c0_40 = arith.constant 0 : index
    %c0_41 = arith.constant 0 : index
    %80 = vector.load %arg7[%c0_40, %c0_41] : memref<2x1xf32, #tpu.memory_space<vmem>>, vector<2x1xf32>
    %81 = vector.broadcast %80 : vector<2x1xf32> to vector<2x2xf32>
    %82 = arith.addf %79, %81 : vector<2x2xf32>
    %c0_42 = arith.constant 0 : index
    %c0_43 = arith.constant 0 : index
    %83 = vector.load %arg8[%c0_42, %c0_43] : memref<2x2xf32, #tpu.memory_space<vmem>>, vector<2x2xf32>
    tpu.vector_store %arg8[%c0_42, %c0_43], %82 {strides = array<i32>} : memref<2x2xf32, #tpu.memory_space<vmem>>, vector<2x2xf32>,
    return
  }
}

</mosaic_0001>

<llo_original>
// kernel: _simple_cnn_forward_impl.1
$region0: #{_simple_cnn_forward_impl.1}
  #allocation0 [shape = 'u32[]', space=smem, size = 0x4, offset = 0x4, fixed_abs, tag = 'smem constant byte address 0x4 - core index']
  #allocation1 [shape = 'u32[72,128]{1,0:T(1,128)}', space=vmem, size = 0x9000, scoped, tag = 'internal scratch']
  #allocation2 [shape = 'bf16[288,512]{1,0:T(8,128)(2,1)}', space=vmem, size = 0x48000, scoped, tag = 'scratch operand']
  %s0 = inlined_call_operand.vmem [shape: bf16[9,512], index: 0, kind: input, shape index: {}]
  %s1 = inlined_call_operand.vmem [shape: f32[9,512], index: 1, kind: input, shape index: {}]
  %s2 = inlined_call_operand.vmem [shape: bf16[32,9], index: 2, kind: input, shape index: {}]
  %s3 = inlined_call_operand.vmem [shape: f32[32,1], index: 3, kind: input, shape index: {}]
  %s4 = inlined_call_operand.vmem [shape: bf16[64,288], index: 4, kind: input, shape index: {}]
  %s5 = inlined_call_operand.vmem [shape: f32[64,1], index: 5, kind: input, shape index: {}]
  %s6 = inlined_call_operand.vmem [shape: f32[2,64], index: 6, kind: input, shape index: {}]
  %s7 = inlined_call_operand.vmem [shape: f32[2,1], index: 7, kind: input, shape index: {}]
  %s8 = inlined_call_operand.vmem [shape: f32[2,2], index: 8, kind: output, shape index: {}]
  %s9 = sld [smem:[#allocation0]]
  $region42: #{_simple_cnn_forward_impl.1} parent=0
    _
  %s11 = ssub.s32 1, %s9
  %s12 = scalar_select 0, %s11, %s9
  // Predicated region
  $region2: #{_simple_cnn_forward_impl.1} parent=0 // pred_check
    _
  $region3: #{_simple_cnn_forward_impl.1} parent=0 // pred_check_branch
    %14 = sbr.rel (0) target = $region5
  $region4: #{_simple_cnn_forward_impl.1} parent=0 // pred_region
    _
  $region5: #{_simple_cnn_forward_impl.1} parent=0 // pred_fallthru
    _
  // Predicated region
  $region6: #{_simple_cnn_forward_impl.1} parent=0 // pred_check
    _
  $region7: #{_simple_cnn_forward_impl.1} parent=0 // pred_check_branch
    %16 = sbr.rel (0) target = $region9
  $region8: #{_simple_cnn_forward_impl.1} parent=0 // pred_region
    _
  $region9: #{_simple_cnn_forward_impl.1} parent=0 // pred_fallthru
    _
  // Predicated region
  $region10: #{_simple_cnn_forward_impl.1} parent=0 // pred_check
    _
  $region11: #{_simple_cnn_forward_impl.1} parent=0 // pred_check_branch
    %18 = sbr.rel (0) target = $region13
  $region12: #{_simple_cnn_forward_impl.1} parent=0 // pred_region
    _
  $region13: #{_simple_cnn_forward_impl.1} parent=0 // pred_fallthru
    _
  // Predicated region
  $region14: #{_simple_cnn_forward_impl.1} parent=0 // pred_check
    _
  $region15: #{_simple_cnn_forward_impl.1} parent=0 // pred_check_branch
    %20 = sbr.rel (0) target = $region17
  $region16: #{_simple_cnn_forward_impl.1} parent=0 // pred_region
    _
  $region17: #{_simple_cnn_forward_impl.1} parent=0 // pred_fallthru
    _
  // Predicated region
  $region18: #{_simple_cnn_forward_impl.1} parent=0 // pred_check
    _
  $region19: #{_simple_cnn_forward_impl.1} parent=0 // pred_check_branch
    %22 = sbr.rel (0) target = $region21
  $region20: #{_simple_cnn_forward_impl.1} parent=0 // pred_region
    _
  $region21: #{_simple_cnn_forward_impl.1} parent=0 // pred_fallthru
    _
  // Predicated region
  $region22: #{_simple_cnn_forward_impl.1} parent=0 // pred_check
    _
  $region23: #{_simple_cnn_forward_impl.1} parent=0 // pred_check_branch
    %24 = sbr.rel (0) target = $region25
  $region24: #{_simple_cnn_forward_impl.1} parent=0 // pred_region
    _
  $region25: #{_simple_cnn_forward_impl.1} parent=0 // pred_fallthru
    _
  // Predicated region
  $region26: #{_simple_cnn_forward_impl.1} parent=0 // pred_check
    _
  $region27: #{_simple_cnn_forward_impl.1} parent=0 // pred_check_branch
    %26 = sbr.rel (0) target = $region29
  $region28: #{_simple_cnn_forward_impl.1} parent=0 // pred_region
    _
  $region29: #{_simple_cnn_forward_impl.1} parent=0 // pred_fallthru
    _
  // Predicated region
  $region30: #{_simple_cnn_forward_impl.1} parent=0 // pred_check
    _
  $region31: #{_simple_cnn_forward_impl.1} parent=0 // pred_check_branch
    %28 = sbr.rel (0) target = $region33
  $region32: #{_simple_cnn_forward_impl.1} parent=0 // pred_region
    _
  $region33: #{_simple_cnn_forward_impl.1} parent=0 // pred_fallthru
    _
  %v30 = vld [vmem:[%s2] sm:$0xf]
  %v31 = vld [vmem:[%s2 + $0x4] sm:$0xf]
  %v32 = vld [vmem:[%s2 + $0x8] sm:$0xf]
  %v33 = vld [vmem:[%s2 + $0xc] sm:$0xf]
  %v34 = vld [vmem:[%s0] sm:$0xff]
  %v35 = vld [vmem:[%s0 + $0x8] sm:$0xff]
  %v36 = vld [vmem:[%s0 + $0x10] sm:$0x11]
  %v37 = vld [vmem:[%s0 + $0x18] sm:$0x11]
  %v38 = vld [vmem:[%s3] sm:$0xff]
  %v39 = vld [vmem:[%s3 + $0x8] sm:$0xff]
  %v40 = vld [vmem:[%s3 + $0x10] sm:$0xff]
  %v41 = vld [vmem:[%s3 + $0x18] sm:$0xff]
  %43 = vset.pattern.permute.xlu0 0
  %44 = vperm.xlu0 %43, %v38
  %v45 = vpop.permute.xlu0 %44
  %48 = vset.pattern.permute.xlu0 0
  %49 = vperm.xlu0 %48, %v39
  %v50 = vpop.permute.xlu0 %49
  %53 = vset.pattern.permute.xlu0 0
  %54 = vperm.xlu0 %53, %v40
  %v55 = vpop.permute.xlu0 %54
  %58 = vset.pattern.permute.xlu0 0
  %59 = vperm.xlu0 %58, %v41
  %v60 = vpop.permute.xlu0 %59
  %v66 = vunpack.c.l.b16 %v30
  %v67 = vunpack.c.l.b16 %v31
  %v68 = vunpack.c.l.b16 %v32
  %v69 = vunpack.c.l.b16 %v33
  %v70 = vpack.c.b16 %v67, %v66
  %v71 = vpack.c.b16 %v69, %v68
  %v76 = vunpack.c.l.b16 %v34
  %v77 = vunpack.c.h.b16 %v34
  %v78 = vunpack.c.l.b16 %v35
  %v79 = vunpack.c.h.b16 %v35
  %v80 = vunpack.c.l.b16 %v36
  %v81 = vunpack.c.h.b16 %v36
  %v82 = vunpack.c.l.b16 %v37
  %v83 = vunpack.c.h.b16 %v37
  %v84 = vpack.c.b16 %v80, %v76
  %v85 = vpack.c.b16 %v81, %v77
  %v86 = vpack.c.b16 %v82, %v78
  %v87 = vpack.c.b16 %v83, %v79
  %vm88 = vcmask 72704
  %v90 = vsel %vm88, %v70, 0
  %v93 = vsel %vm88, %v71, 0
  %vm95 = vcmask 1043456
  %vm96 = vcmask 1044480
  %v97 = vsel %vm95, 4294967295, 65535
  %v98 = vsel %vm96, %v97, 0
  %v100 = vand.u32 %v84, %v98
  %v103 = vand.u32 %v85, %v98
  %v106 = vand.u32 %v86, %v98
  %v109 = vand.u32 %v87, %v98
  %111 = vmatpush.bf16.msra.mxu0 0
  %112 = vmatpush.bf16.msra.mxu0 0
  %113 = vmatpush.bf16.msra.mxu0 0
  %114 = vmatpush.bf16.msra.mxu0 0
  %115 = vmatpush.bf16.msra.mxu0 0
  %116 = vmatpush.bf16.msra.mxu0 0
  %117 = vmatpush.bf16.msra.mxu0 0
  %118 = vmatpush.bf16.msra.mxu0 %v100
  %119 = vmatmul.bf16.gmra.mxu0 %v90
  %v120 = vpop.f32.mrf.mxu0
  %v121 = vadd.f32 %v45, %v120
  %v122 = vpop.f32.mrf.mxu0
  %v123 = vadd.f32 %v50, %v122
  %124 = vmatmul.bf16.gmra.mxu0 %v93
  %v125 = vpop.f32.mrf.mxu0
  %v126 = vadd.f32 %v55, %v125
  %v127 = vpop.f32.mrf.mxu0
  %v128 = vadd.f32 %v60, %v127
  %129 = vdwg.mxu0
  %130 = vmatpush.bf16.msra.mxu0 0
  %131 = vmatpush.bf16.msra.mxu0 0
  %132 = vmatpush.bf16.msra.mxu0 0
  %133 = vmatpush.bf16.msra.mxu0 0
  %134 = vmatpush.bf16.msra.mxu0 0
  %135 = vmatpush.bf16.msra.mxu0 0
  %136 = vmatpush.bf16.msra.mxu0 0
  %137 = vmatpush.bf16.msra.mxu0 %v103
  %138 = vmatmul.bf16.gmra.mxu0 %v90
  %v139 = vpop.f32.mrf.mxu0
  %v140 = vadd.f32 %v45, %v139
  %v141 = vpop.f32.mrf.mxu0
  %v142 = vadd.f32 %v50, %v141
  %143 = vmatmul.bf16.gmra.mxu0 %v93
  %v144 = vpop.f32.mrf.mxu0
  %v145 = vadd.f32 %v55, %v144
  %v146 = vpop.f32.mrf.mxu0
  %v147 = vadd.f32 %v60, %v146
  %148 = vdwg.mxu0
  %149 = vmatpush.bf16.msra.mxu0 0
  %150 = vmatpush.bf16.msra.mxu0 0
  %151 = vmatpush.bf16.msra.mxu0 0
  %152 = vmatpush.bf16.msra.mxu0 0
  %153 = vmatpush.bf16.msra.mxu0 0
  %154 = vmatpush.bf16.msra.mxu0 0
  %155 = vmatpush.bf16.msra.mxu0 0
  %156 = vmatpush.bf16.msra.mxu0 %v106
  %157 = vmatmul.bf16.gmra.mxu0 %v90
  %v158 = vpop.f32.mrf.mxu0
  %v159 = vadd.f32 %v45, %v158
  %v160 = vpop.f32.mrf.mxu0
  %v161 = vadd.f32 %v50, %v160
  %162 = vmatmul.bf16.gmra.mxu0 %v93
  %v163 = vpop.f32.mrf.mxu0
  %v164 = vadd.f32 %v55, %v163
  %v165 = vpop.f32.mrf.mxu0
  %v166 = vadd.f32 %v60, %v165
  %167 = vdwg.mxu0
  %168 = vmatpush.bf16.msra.mxu0 0
  %169 = vmatpush.bf16.msra.mxu0 0
  %170 = vmatpush.bf16.msra.mxu0 0
  %171 = vmatpush.bf16.msra.mxu0 0
  %172 = vmatpush.bf16.msra.mxu0 0
  %173 = vmatpush.bf16.msra.mxu0 0
  %174 = vmatpush.bf16.msra.mxu0 0
  %175 = vmatpush.bf16.msra.mxu0 %v109
  %176 = vmatmul.bf16.gmra.mxu0 %v90
  %v177 = vpop.f32.mrf.mxu0
  %v178 = vadd.f32 %v45, %v177
  %v179 = vpop.f32.mrf.mxu0
  %v180 = vadd.f32 %v50, %v179
  %181 = vmatmul.bf16.gmra.mxu0 %v93
  %v182 = vpop.f32.mrf.mxu0
  %v183 = vadd.f32 %v55, %v182
  %v184 = vpop.f32.mrf.mxu0
  %v185 = vadd.f32 %v60, %v184
  %186 = vdwg.mxu0
  %v187 = vmax.f32 %v121, 0.0
  %v188 = vmax.f32 %v140, 0.0
  %v189 = vmax.f32 %v159, 0.0
  %v190 = vmax.f32 %v178, 0.0
  %v191 = vmax.f32 %v123, 0.0
  %v192 = vmax.f32 %v142, 0.0
  %v193 = vmax.f32 %v161, 0.0
  %v194 = vmax.f32 %v180, 0.0
  %v195 = vmax.f32 %v126, 0.0
  %v196 = vmax.f32 %v145, 0.0
  %v197 = vmax.f32 %v164, 0.0
  %v198 = vmax.f32 %v183, 0.0
  %v199 = vmax.f32 %v128, 0.0
  %v200 = vmax.f32 %v147, 0.0
  %v201 = vmax.f32 %v166, 0.0
  %v202 = vmax.f32 %v185, 0.0
  %203 = vrot.lane.b32.xlu0 %v187, 17
  %v204 = vpop.permute.xlu0 %203
  %205 = vrot.lane.b32.xlu0 %v191, 17
  %v206 = vpop.permute.xlu0 %205
  %207 = vrot.lane.b32.xlu0 %v195, 17
  %v208 = vpop.permute.xlu0 %207
  %209 = vrot.lane.b32.xlu0 %v199, 17
  %v210 = vpop.permute.xlu0 %209
  %211 = vrot.lane.b32.xlu0 %v188, 17
  %v212 = vpop.permute.xlu0 %211
  %213 = vrot.lane.b32.xlu0 %v192, 17
  %v214 = vpop.permute.xlu0 %213
  %215 = vrot.lane.b32.xlu0 %v196, 17
  %v216 = vpop.permute.xlu0 %215
  %217 = vrot.lane.b32.xlu0 %v200, 17
  %v218 = vpop.permute.xlu0 %217
  %219 = vrot.lane.b32.xlu0 %v189, 17
  %v220 = vpop.permute.xlu0 %219
  %221 = vrot.lane.b32.xlu0 %v193, 17
  %v222 = vpop.permute.xlu0 %221
  %223 = vrot.lane.b32.xlu0 %v197, 17
  %v224 = vpop.permute.xlu0 %223
  %225 = vrot.lane.b32.xlu0 %v201, 17
  %v226 = vpop.permute.xlu0 %225
  %227 = vrot.lane.b32.xlu0 %v190, 17
  %v228 = vpop.permute.xlu0 %227
  %229 = vrot.lane.b32.xlu0 %v194, 17
  %v230 = vpop.permute.xlu0 %229
  %231 = vrot.lane.b32.xlu0 %v198, 17
  %v232 = vpop.permute.xlu0 %231
  %233 = vrot.lane.b32.xlu0 %v202, 17
  %v234 = vpop.permute.xlu0 %233
  %v235 = vlaneseq
  %v236 = vand.u32 %v235, 127
  %vm237 = vcmp.lt.s32.totalorder %v236, 17
  %v238 = vsel %vm237, %v220, %v228
  %v239 = vsel %vm237, %v222, %v230
  %v240 = vsel %vm237, %v224, %v232
  %v241 = vsel %vm237, %v226, %v234
  %v242 = vsel %vm237, %v212, %v220
  %v243 = vsel %vm237, %v214, %v222
  %v244 = vsel %vm237, %v216, %v224
  %v245 = vsel %vm237, %v218, %v226
  %v246 = vsel %vm237, %v204, %v212
  %v247 = vsel %vm237, %v206, %v214
  %v248 = vsel %vm237, %v208, %v216
  %v249 = vsel %vm237, %v210, %v218
  %v250 = vsel %vm237, %v228, %v204
  %v251 = vsel %vm237, %v230, %v206
  %v252 = vsel %vm237, %v232, %v208
  %v253 = vsel %vm237, %v234, %v210
  %v254 = vld [vmem:[%s1] ss:$8 sm:$0xf]
  %v256 = vperm.slane %v254, 0
  %v257 = vperm.slane %v254, 1
  %v258 = vperm.slane %v254, 2
  %v259 = vperm.slane %v254, 3
  %v264 = vmul.f32 %v250, %v256
  %v265 = vmul.f32 %v246, %v257
  %v266 = vmul.f32 %v242, %v258
  %v267 = vmul.f32 %v238, %v259
  %v268 = vmul.f32 %v251, %v256
  %v269 = vmul.f32 %v247, %v257
  %v270 = vmul.f32 %v243, %v258
  %v271 = vmul.f32 %v239, %v259
  %v272 = vmul.f32 %v252, %v256
  %v273 = vmul.f32 %v248, %v257
  %v274 = vmul.f32 %v244, %v258
  %v275 = vmul.f32 %v240, %v259
  %v276 = vmul.f32 %v253, %v256
  %v277 = vmul.f32 %v249, %v257
  %v278 = vmul.f32 %v245, %v258
  %v279 = vmul.f32 %v241, %v259
  %v280 = vpack.c.bf16 %v265, %v264
  %v281 = vpack.c.bf16 %v267, %v266
  %v282 = vpack.c.bf16 %v269, %v268
  %v283 = vpack.c.bf16 %v271, %v270
  %v284 = vpack.c.bf16 %v273, %v272
  %v285 = vpack.c.bf16 %v275, %v274
  %v286 = vpack.c.bf16 %v277, %v276
  %v287 = vpack.c.bf16 %v279, %v278
  %288 = vst [vmem:[#allocation2] sm:$0xff] %v280
  %289 = vst [vmem:[#allocation2 + $0x8] sm:$0xff] %v281
  %290 = vst [vmem:[#allocation2 + $0x10] sm:$0xff] %v282
  %291 = vst [vmem:[#allocation2 + $0x18] sm:$0xff] %v283
  %292 = vst [vmem:[#allocation2 + $0x20] sm:$0xff] %v284
  %293 = vst [vmem:[#allocation2 + $0x28] sm:$0xff] %v285
  %294 = vst [vmem:[#allocation2 + $0x30] sm:$0xff] %v286
  %295 = vst [vmem:[#allocation2 + $0x38] sm:$0xff] %v287
  %296 = vrot.lane.b32.xlu0 %v187, 16
  %v297 = vpop.permute.xlu0 %296
  %298 = vrot.lane.b32.xlu0 %v191, 16
  %v299 = vpop.permute.xlu0 %298
  %300 = vrot.lane.b32.xlu0 %v195, 16
  %v301 = vpop.permute.xlu0 %300
  %302 = vrot.lane.b32.xlu0 %v199, 16
  %v303 = vpop.permute.xlu0 %302
  %304 = vrot.lane.b32.xlu0 %v188, 16
  %v305 = vpop.permute.xlu0 %304
  %306 = vrot.lane.b32.xlu0 %v192, 16
  %v307 = vpop.permute.xlu0 %306
  %308 = vrot.lane.b32.xlu0 %v196, 16
  %v309 = vpop.permute.xlu0 %308
  %310 = vrot.lane.b32.xlu0 %v200, 16
  %v311 = vpop.permute.xlu0 %310
  %312 = vrot.lane.b32.xlu0 %v189, 16
  %v313 = vpop.permute.xlu0 %312
  %314 = vrot.lane.b32.xlu0 %v193, 16
  %v315 = vpop.permute.xlu0 %314
  %316 = vrot.lane.b32.xlu0 %v197, 16
  %v317 = vpop.permute.xlu0 %316
  %318 = vrot.lane.b32.xlu0 %v201, 16
  %v319 = vpop.permute.xlu0 %318
  %320 = vrot.lane.b32.xlu0 %v190, 16
  %v321 = vpop.permute.xlu0 %320
  %322 = vrot.lane.b32.xlu0 %v194, 16
  %v323 = vpop.permute.xlu0 %322
  %324 = vrot.lane.b32.xlu0 %v198, 16
  %v325 = vpop.permute.xlu0 %324
  %326 = vrot.lane.b32.xlu0 %v202, 16
  %v327 = vpop.permute.xlu0 %326
  %vm328 = vcmp.lt.s32.totalorder %v236, 16
  %v329 = vsel %vm328, %v313, %v321
  %v330 = vsel %vm328, %v315, %v323
  %v331 = vsel %vm328, %v317, %v325
  %v332 = vsel %vm328, %v319, %v327
  %v333 = vsel %vm328, %v305, %v313
  %v334 = vsel %vm328, %v307, %v315
  %v335 = vsel %vm328, %v309, %v317
  %v336 = vsel %vm328, %v311, %v319
  %v337 = vsel %vm328, %v297, %v305
  %v338 = vsel %vm328, %v299, %v307
  %v339 = vsel %vm328, %v301, %v309
  %v340 = vsel %vm328, %v303, %v311
  %v341 = vsel %vm328, %v321, %v297
  %v342 = vsel %vm328, %v323, %v299
  %v343 = vsel %vm328, %v325, %v301
  %v344 = vsel %vm328, %v327, %v303
  %s345 = scalar_lea.vmem %s1, 1
  %v346 = vld [vmem:[%s345] ss:$8 sm:$0xf]
  %v348 = vperm.slane %v346, 0
  %v349 = vperm.slane %v346, 1
  %v350 = vperm.slane %v346, 2
  %v351 = vperm.slane %v346, 3
  %v356 = vmul.f32 %v341, %v348
  %v357 = vmul.f32 %v337, %v349
  %v358 = vmul.f32 %v333, %v350
  %v359 = vmul.f32 %v329, %v351
  %v360 = vmul.f32 %v342, %v348
  %v361 = vmul.f32 %v338, %v349
  %v362 = vmul.f32 %v334, %v350
  %v363 = vmul.f32 %v330, %v351
  %v364 = vmul.f32 %v343, %v348
  %v365 = vmul.f32 %v339, %v349
  %v366 = vmul.f32 %v335, %v350
  %v367 = vmul.f32 %v331, %v351
  %v368 = vmul.f32 %v344, %v348
  %v369 = vmul.f32 %v340, %v349
  %v370 = vmul.f32 %v336, %v350
  %v371 = vmul.f32 %v332, %v351
  %v372 = vpack.c.bf16 %v357, %v356
  %v373 = vpack.c.bf16 %v359, %v358
  %v374 = vpack.c.bf16 %v361, %v360
  %v375 = vpack.c.bf16 %v363, %v362
  %v376 = vpack.c.bf16 %v365, %v364
  %v377 = vpack.c.bf16 %v367, %v366
  %v378 = vpack.c.bf16 %v369, %v368
  %v379 = vpack.c.bf16 %v371, %v370
  %380 = vst [vmem:[#allocation2 + $0x40] sm:$0xff] %v372
  %381 = vst [vmem:[#allocation2 + $0x48] sm:$0xff] %v373
  %382 = vst [vmem:[#allocation2 + $0x50] sm:$0xff] %v374
  %383 = vst [vmem:[#allocation2 + $0x58] sm:$0xff] %v375
  %384 = vst [vmem:[#allocation2 + $0x60] sm:$0xff] %v376
  %385 = vst [vmem:[#allocation2 + $0x68] sm:$0xff] %v377
  %386 = vst [vmem:[#allocation2 + $0x70] sm:$0xff] %v378
  %387 = vst [vmem:[#allocation2 + $0x78] sm:$0xff] %v379
  %388 = vrot.lane.b32.xlu0 %v187, 15
  %v389 = vpop.permute.xlu0 %388
  %390 = vrot.lane.b32.xlu0 %v191, 15
  %v391 = vpop.permute.xlu0 %390
  %392 = vrot.lane.b32.xlu0 %v195, 15
  %v393 = vpop.permute.xlu0 %392
  %394 = vrot.lane.b32.xlu0 %v199, 15
  %v395 = vpop.permute.xlu0 %394
  %396 = vrot.lane.b32.xlu0 %v188, 15
  %v397 = vpop.permute.xlu0 %396
  %398 = vrot.lane.b32.xlu0 %v192, 15
  %v399 = vpop.permute.xlu0 %398
  %400 = vrot.lane.b32.xlu0 %v196, 15
  %v401 = vpop.permute.xlu0 %400
  %402 = vrot.lane.b32.xlu0 %v200, 15
  %v403 = vpop.permute.xlu0 %402
  %404 = vrot.lane.b32.xlu0 %v189, 15
  %v405 = vpop.permute.xlu0 %404
  %406 = vrot.lane.b32.xlu0 %v193, 15
  %v407 = vpop.permute.xlu0 %406
  %408 = vrot.lane.b32.xlu0 %v197, 15
  %v409 = vpop.permute.xlu0 %408
  %410 = vrot.lane.b32.xlu0 %v201, 15
  %v411 = vpop.permute.xlu0 %410
  %412 = vrot.lane.b32.xlu0 %v190, 15
  %v413 = vpop.permute.xlu0 %412
  %414 = vrot.lane.b32.xlu0 %v194, 15
  %v415 = vpop.permute.xlu0 %414
  %416 = vrot.lane.b32.xlu0 %v198, 15
  %v417 = vpop.permute.xlu0 %416
  %418 = vrot.lane.b32.xlu0 %v202, 15
  %v419 = vpop.permute.xlu0 %418
  %vm420 = vcmp.lt.s32.totalorder %v236, 15
  %v421 = vsel %vm420, %v405, %v413
  %v422 = vsel %vm420, %v407, %v415
  %v423 = vsel %vm420, %v409, %v417
  %v424 = vsel %vm420, %v411, %v419
  %v425 = vsel %vm420, %v397, %v405
  %v426 = vsel %vm420, %v399, %v407
  %v427 = vsel %vm420, %v401, %v409
  %v428 = vsel %vm420, %v403, %v411
  %v429 = vsel %vm420, %v389, %v397
  %v430 = vsel %vm420, %v391, %v399
  %v431 = vsel %vm420, %v393, %v401
  %v432 = vsel %vm420, %v395, %v403
  %v433 = vsel %vm420, %v413, %v389
  %v434 = vsel %vm420, %v415, %v391
  %v435 = vsel %vm420, %v417, %v393
  %v436 = vsel %vm420, %v419, %v395
  %s437 = scalar_lea.vmem %s1, 2
  %v438 = vld [vmem:[%s437] ss:$8 sm:$0xf]
  %v440 = vperm.slane %v438, 0
  %v441 = vperm.slane %v438, 1
  %v442 = vperm.slane %v438, 2
  %v443 = vperm.slane %v438, 3
  %v448 = vmul.f32 %v433, %v440
  %v449 = vmul.f32 %v429, %v441
  %v450 = vmul.f32 %v425, %v442
  %v451 = vmul.f32 %v421, %v443
  %v452 = vmul.f32 %v434, %v440
  %v453 = vmul.f32 %v430, %v441
  %v454 = vmul.f32 %v426, %v442
  %v455 = vmul.f32 %v422, %v443
  %v456 = vmul.f32 %v435, %v440
  %v457 = vmul.f32 %v431, %v441
  %v458 = vmul.f32 %v427, %v442
  %v459 = vmul.f32 %v423, %v443
  %v460 = vmul.f32 %v436, %v440
  %v461 = vmul.f32 %v432, %v441
  %v462 = vmul.f32 %v428, %v442
  %v463 = vmul.f32 %v424, %v443
  %v464 = vpack.c.bf16 %v449, %v448
  %v465 = vpack.c.bf16 %v451, %v450
  %v466 = vpack.c.bf16 %v453, %v452
  %v467 = vpack.c.bf16 %v455, %v454
  %v468 = vpack.c.bf16 %v457, %v456
  %v469 = vpack.c.bf16 %v459, %v458
  %v470 = vpack.c.bf16 %v461, %v460
  %v471 = vpack.c.bf16 %v463, %v462
  %472 = vst [vmem:[#allocation2 + $0x80] sm:$0xff] %v464
  %473 = vst [vmem:[#allocation2 + $0x88] sm:$0xff] %v465
  %474 = vst [vmem:[#allocation2 + $0x90] sm:$0xff] %v466
  %475 = vst [vmem:[#allocation2 + $0x98] sm:$0xff] %v467
  %476 = vst [vmem:[#allocation2 + $0xa0] sm:$0xff] %v468
  %477 = vst [vmem:[#allocation2 + $0xa8] sm:$0xff] %v469
  %478 = vst [vmem:[#allocation2 + $0xb0] sm:$0xff] %v470
  %479 = vst [vmem:[#allocation2 + $0xb8] sm:$0xff] %v471
  %480 = vrot.lane.b32.xlu0 %v187, 1
  %v481 = vpop.permute.xlu0 %480
  %482 = vrot.lane.b32.xlu0 %v191, 1
  %v483 = vpop.permute.xlu0 %482
  %484 = vrot.lane.b32.xlu0 %v195, 1
  %v485 = vpop.permute.xlu0 %484
  %486 = vrot.lane.b32.xlu0 %v199, 1
  %v487 = vpop.permute.xlu0 %486
  %488 = vrot.lane.b32.xlu0 %v188, 1
  %v489 = vpop.permute.xlu0 %488
  %490 = vrot.lane.b32.xlu0 %v192, 1
  %v491 = vpop.permute.xlu0 %490
  %492 = vrot.lane.b32.xlu0 %v196, 1
  %v493 = vpop.permute.xlu0 %492
  %494 = vrot.lane.b32.xlu0 %v200, 1
  %v495 = vpop.permute.xlu0 %494
  %496 = vrot.lane.b32.xlu0 %v189, 1
  %v497 = vpop.permute.xlu0 %496
  %498 = vrot.lane.b32.xlu0 %v193, 1
  %v499 = vpop.permute.xlu0 %498
  %500 = vrot.lane.b32.xlu0 %v197, 1
  %v501 = vpop.permute.xlu0 %500
  %502 = vrot.lane.b32.xlu0 %v201, 1
  %v503 = vpop.permute.xlu0 %502
  %504 = vrot.lane.b32.xlu0 %v190, 1
  %v505 = vpop.permute.xlu0 %504
  %506 = vrot.lane.b32.xlu0 %v194, 1
  %v507 = vpop.permute.xlu0 %506
  %508 = vrot.lane.b32.xlu0 %v198, 1
  %v509 = vpop.permute.xlu0 %508
  %510 = vrot.lane.b32.xlu0 %v202, 1
  %v511 = vpop.permute.xlu0 %510
  %vm512 = vcmp.lt.s32.totalorder %v236, 1
  %v513 = vsel %vm512, %v497, %v505
  %v514 = vsel %vm512, %v499, %v507
  %v515 = vsel %vm512, %v501, %v509
  %v516 = vsel %vm512, %v503, %v511
  %v517 = vsel %vm512, %v489, %v497
  %v518 = vsel %vm512, %v491, %v499
  %v519 = vsel %vm512, %v493, %v501
  %v520 = vsel %vm512, %v495, %v503
  %v521 = vsel %vm512, %v481, %v489
  %v522 = vsel %vm512, %v483, %v491
  %v523 = vsel %vm512, %v485, %v493
  %v524 = vsel %vm512, %v487, %v495
  %v525 = vsel %vm512, %v505, %v481
  %v526 = vsel %vm512, %v507, %v483
  %v527 = vsel %vm512, %v509, %v485
  %v528 = vsel %vm512, %v511, %v487
  %s529 = scalar_lea.vmem %s1, 3
  %v530 = vld [vmem:[%s529] ss:$8 sm:$0xf]
  %v532 = vperm.slane %v530, 0
  %v533 = vperm.slane %v530, 1
  %v534 = vperm.slane %v530, 2
  %v535 = vperm.slane %v530, 3
  %v540 = vmul.f32 %v525, %v532
  %v541 = vmul.f32 %v521, %v533
  %v542 = vmul.f32 %v517, %v534
  %v543 = vmul.f32 %v513, %v535
  %v544 = vmul.f32 %v526, %v532
  %v545 = vmul.f32 %v522, %v533
  %v546 = vmul.f32 %v518, %v534
  %v547 = vmul.f32 %v514, %v535
  %v548 = vmul.f32 %v527, %v532
  %v549 = vmul.f32 %v523, %v533
  %v550 = vmul.f32 %v519, %v534
  %v551 = vmul.f32 %v515, %v535
  %v552 = vmul.f32 %v528, %v532
  %v553 = vmul.f32 %v524, %v533
  %v554 = vmul.f32 %v520, %v534
  %v555 = vmul.f32 %v516, %v535
  %v556 = vpack.c.bf16 %v541, %v540
  %v557 = vpack.c.bf16 %v543, %v542
  %v558 = vpack.c.bf16 %v545, %v544
  %v559 = vpack.c.bf16 %v547, %v546
  %v560 = vpack.c.bf16 %v549, %v548
  %v561 = vpack.c.bf16 %v551, %v550
  %v562 = vpack.c.bf16 %v553, %v552
  %v563 = vpack.c.bf16 %v555, %v554
  %564 = vst [vmem:[#allocation2 + $0xc0] sm:$0xff] %v556
  %565 = vst [vmem:[#allocation2 + $0xc8] sm:$0xff] %v557
  %566 = vst [vmem:[#allocation2 + $0xd0] sm:$0xff] %v558
  %567 = vst [vmem:[#allocation2 + $0xd8] sm:$0xff] %v559
  %568 = vst [vmem:[#allocation2 + $0xe0] sm:$0xff] %v560
  %569 = vst [vmem:[#allocation2 + $0xe8] sm:$0xff] %v561
  %570 = vst [vmem:[#allocation2 + $0xf0] sm:$0xff] %v562
  %571 = vst [vmem:[#allocation2 + $0xf8] sm:$0xff] %v563
  %s572 = scalar_lea.vmem %s1, 4
  %v573 = vld [vmem:[%s572] ss:$8 sm:$0xf]
  %v575 = vperm.slane %v573, 0
  %v576 = vperm.slane %v573, 1
  %v577 = vperm.slane %v573, 2
  %v578 = vperm.slane %v573, 3
  %v583 = vmul.f32 %v187, %v575
  %v584 = vmul.f32 %v188, %v576
  %v585 = vmul.f32 %v189, %v577
  %v586 = vmul.f32 %v190, %v578
  %v587 = vmul.f32 %v191, %v575
  %v588 = vmul.f32 %v192, %v576
  %v589 = vmul.f32 %v193, %v577
  %v590 = vmul.f32 %v194, %v578
  %v591 = vmul.f32 %v195, %v575
  %v592 = vmul.f32 %v196, %v576
  %v593 = vmul.f32 %v197, %v577
  %v594 = vmul.f32 %v198, %v578
  %v595 = vmul.f32 %v199, %v575
  %v596 = vmul.f32 %v200, %v576
  %v597 = vmul.f32 %v201, %v577
  %v598 = vmul.f32 %v202, %v578
  %v599 = vpack.c.bf16 %v584, %v583
  %v600 = vpack.c.bf16 %v586, %v585
  %v601 = vpack.c.bf16 %v588, %v587
  %v602 = vpack.c.bf16 %v590, %v589
  %v603 = vpack.c.bf16 %v592, %v591
  %v604 = vpack.c.bf16 %v594, %v593
  %v605 = vpack.c.bf16 %v596, %v595
  %v606 = vpack.c.bf16 %v598, %v597
  %607 = vst [vmem:[#allocation2 + $0x100] sm:$0xff] %v599
  %608 = vst [vmem:[#allocation2 + $0x108] sm:$0xff] %v600
  %609 = vst [vmem:[#allocation2 + $0x110] sm:$0xff] %v601
  %610 = vst [vmem:[#allocation2 + $0x118] sm:$0xff] %v602
  %611 = vst [vmem:[#allocation2 + $0x120] sm:$0xff] %v603
  %612 = vst [vmem:[#allocation2 + $0x128] sm:$0xff] %v604
  %613 = vst [vmem:[#allocation2 + $0x130] sm:$0xff] %v605
  %614 = vst [vmem:[#allocation2 + $0x138] sm:$0xff] %v606
  %615 = vrot.lane.b32.xlu0 %v187, 127
  %v616 = vpop.permute.xlu0 %615
  %617 = vrot.lane.b32.xlu0 %v191, 127
  %v618 = vpop.permute.xlu0 %617
  %619 = vrot.lane.b32.xlu0 %v195, 127
  %v620 = vpop.permute.xlu0 %619
  %621 = vrot.lane.b32.xlu0 %v199, 127
  %v622 = vpop.permute.xlu0 %621
  %623 = vrot.lane.b32.xlu0 %v188, 127
  %v624 = vpop.permute.xlu0 %623
  %625 = vrot.lane.b32.xlu0 %v192, 127
  %v626 = vpop.permute.xlu0 %625
  %627 = vrot.lane.b32.xlu0 %v196, 127
  %v628 = vpop.permute.xlu0 %627
  %629 = vrot.lane.b32.xlu0 %v200, 127
  %v630 = vpop.permute.xlu0 %629
  %631 = vrot.lane.b32.xlu0 %v189, 127
  %v632 = vpop.permute.xlu0 %631
  %633 = vrot.lane.b32.xlu0 %v193, 127
  %v634 = vpop.permute.xlu0 %633
  %635 = vrot.lane.b32.xlu0 %v197, 127
  %v636 = vpop.permute.xlu0 %635
  %637 = vrot.lane.b32.xlu0 %v201, 127
  %v638 = vpop.permute.xlu0 %637
  %639 = vrot.lane.b32.xlu0 %v190, 127
  %v640 = vpop.permute.xlu0 %639
  %641 = vrot.lane.b32.xlu0 %v194, 127
  %v642 = vpop.permute.xlu0 %641
  %643 = vrot.lane.b32.xlu0 %v198, 127
  %v644 = vpop.permute.xlu0 %643
  %645 = vrot.lane.b32.xlu0 %v202, 127
  %v646 = vpop.permute.xlu0 %645
  %vm647 = vcmp.lt.s32.totalorder %v236, 127
  %v648 = vsel %vm647, %v632, %v640
  %v649 = vsel %vm647, %v634, %v642
  %v650 = vsel %vm647, %v636, %v644
  %v651 = vsel %vm647, %v638, %v646
  %v652 = vsel %vm647, %v624, %v632
  %v653 = vsel %vm647, %v626, %v634
  %v654 = vsel %vm647, %v628, %v636
  %v655 = vsel %vm647, %v630, %v638
  %v656 = vsel %vm647, %v616, %v624
  %v657 = vsel %vm647, %v618, %v626
  %v658 = vsel %vm647, %v620, %v628
  %v659 = vsel %vm647, %v622, %v630
  %v660 = vsel %vm647, %v640, %v616
  %v661 = vsel %vm647, %v642, %v618
  %v662 = vsel %vm647, %v644, %v620
  %v663 = vsel %vm647, %v646, %v622
  %s664 = scalar_lea.vmem %s1, 5
  %v665 = vld [vmem:[%s664] ss:$8 sm:$0xf]
  %v667 = vperm.slane %v665, 0
  %v668 = vperm.slane %v665, 1
  %v669 = vperm.slane %v665, 2
  %v670 = vperm.slane %v665, 3
  %v675 = vmul.f32 %v656, %v667
  %v676 = vmul.f32 %v652, %v668
  %v677 = vmul.f32 %v648, %v669
  %v678 = vmul.f32 %v660, %v670
  %v679 = vmul.f32 %v657, %v667
  %v680 = vmul.f32 %v653, %v668
  %v681 = vmul.f32 %v649, %v669
  %v682 = vmul.f32 %v661, %v670
  %v683 = vmul.f32 %v658, %v667
  %v684 = vmul.f32 %v654, %v668
  %v685 = vmul.f32 %v650, %v669
  %v686 = vmul.f32 %v662, %v670
  %v687 = vmul.f32 %v659, %v667
  %v688 = vmul.f32 %v655, %v668
  %v689 = vmul.f32 %v651, %v669
  %v690 = vmul.f32 %v663, %v670
  %v691 = vpack.c.bf16 %v676, %v675
  %v692 = vpack.c.bf16 %v678, %v677
  %v693 = vpack.c.bf16 %v680, %v679
  %v694 = vpack.c.bf16 %v682, %v681
  %v695 = vpack.c.bf16 %v684, %v683
  %v696 = vpack.c.bf16 %v686, %v685
  %v697 = vpack.c.bf16 %v688, %v687
  %v698 = vpack.c.bf16 %v690, %v689
  %699 = vst [vmem:[#allocation2 + $0x140] sm:$0xff] %v691
  %700 = vst [vmem:[#allocation2 + $0x148] sm:$0xff] %v692
  %701 = vst [vmem:[#allocation2 + $0x150] sm:$0xff] %v693
  %702 = vst [vmem:[#allocation2 + $0x158] sm:$0xff] %v694
  %703 = vst [vmem:[#allocation2 + $0x160] sm:$0xff] %v695
  %704 = vst [vmem:[#allocation2 + $0x168] sm:$0xff] %v696
  %705 = vst [vmem:[#allocation2 + $0x170] sm:$0xff] %v697
  %706 = vst [vmem:[#allocation2 + $0x178] sm:$0xff] %v698
  %707 = vrot.lane.b32.xlu0 %v187, 113
  %v708 = vpop.permute.xlu0 %707
  %709 = vrot.lane.b32.xlu0 %v191, 113
  %v710 = vpop.permute.xlu0 %709
  %711 = vrot.lane.b32.xlu0 %v195, 113
  %v712 = vpop.permute.xlu0 %711
  %713 = vrot.lane.b32.xlu0 %v199, 113
  %v714 = vpop.permute.xlu0 %713
  %715 = vrot.lane.b32.xlu0 %v188, 113
  %v716 = vpop.permute.xlu0 %715
  %717 = vrot.lane.b32.xlu0 %v192, 113
  %v718 = vpop.permute.xlu0 %717
  %719 = vrot.lane.b32.xlu0 %v196, 113
  %v720 = vpop.permute.xlu0 %719
  %721 = vrot.lane.b32.xlu0 %v200, 113
  %v722 = vpop.permute.xlu0 %721
  %723 = vrot.lane.b32.xlu0 %v189, 113
  %v724 = vpop.permute.xlu0 %723
  %725 = vrot.lane.b32.xlu0 %v193, 113
  %v726 = vpop.permute.xlu0 %725
  %727 = vrot.lane.b32.xlu0 %v197, 113
  %v728 = vpop.permute.xlu0 %727
  %729 = vrot.lane.b32.xlu0 %v201, 113
  %v730 = vpop.permute.xlu0 %729
  %731 = vrot.lane.b32.xlu0 %v190, 113
  %v732 = vpop.permute.xlu0 %731
  %733 = vrot.lane.b32.xlu0 %v194, 113
  %v734 = vpop.permute.xlu0 %733
  %735 = vrot.lane.b32.xlu0 %v198, 113
  %v736 = vpop.permute.xlu0 %735
  %737 = vrot.lane.b32.xlu0 %v202, 113
  %v738 = vpop.permute.xlu0 %737
  %vm739 = vcmp.lt.s32.totalorder %v236, 113
  %v740 = vsel %vm739, %v724, %v732
  %v741 = vsel %vm739, %v726, %v734
  %v742 = vsel %vm739, %v728, %v736
  %v743 = vsel %vm739, %v730, %v738
  %v744 = vsel %vm739, %v716, %v724
  %v745 = vsel %vm739, %v718, %v726
  %v746 = vsel %vm739, %v720, %v728
  %v747 = vsel %vm739, %v722, %v730
  %v748 = vsel %vm739, %v708, %v716
  %v749 = vsel %vm739, %v710, %v718
  %v750 = vsel %vm739, %v712, %v720
  %v751 = vsel %vm739, %v714, %v722
  %v752 = vsel %vm739, %v732, %v708
  %v753 = vsel %vm739, %v734, %v710
  %v754 = vsel %vm739, %v736, %v712
  %v755 = vsel %vm739, %v738, %v714
  %s756 = scalar_lea.vmem %s1, 6
  %v757 = vld [vmem:[%s756] ss:$8 sm:$0xf]
  %v759 = vperm.slane %v757, 0
  %v760 = vperm.slane %v757, 1
  %v761 = vperm.slane %v757, 2
  %v762 = vperm.slane %v757, 3
  %v767 = vmul.f32 %v748, %v759
  %v768 = vmul.f32 %v744, %v760
  %v769 = vmul.f32 %v740, %v761
  %v770 = vmul.f32 %v752, %v762
  %v771 = vmul.f32 %v749, %v759
  %v772 = vmul.f32 %v745, %v760
  %v773 = vmul.f32 %v741, %v761
  %v774 = vmul.f32 %v753, %v762
  %v775 = vmul.f32 %v750, %v759
  %v776 = vmul.f32 %v746, %v760
  %v777 = vmul.f32 %v742, %v761
  %v778 = vmul.f32 %v754, %v762
  %v779 = vmul.f32 %v751, %v759
  %v780 = vmul.f32 %v747, %v760
  %v781 = vmul.f32 %v743, %v761
  %v782 = vmul.f32 %v755, %v762
  %v783 = vpack.c.bf16 %v768, %v767
  %v784 = vpack.c.bf16 %v770, %v769
  %v785 = vpack.c.bf16 %v772, %v771
  %v786 = vpack.c.bf16 %v774, %v773
  %v787 = vpack.c.bf16 %v776, %v775
  %v788 = vpack.c.bf16 %v778, %v777
  %v789 = vpack.c.bf16 %v780, %v779
  %v790 = vpack.c.bf16 %v782, %v781
  %791 = vst [vmem:[#allocation2 + $0x180] sm:$0xff] %v783
  %792 = vst [vmem:[#allocation2 + $0x188] sm:$0xff] %v784
  %793 = vst [vmem:[#allocation2 + $0x190] sm:$0xff] %v785
  %794 = vst [vmem:[#allocation2 + $0x198] sm:$0xff] %v786
  %795 = vst [vmem:[#allocation2 + $0x1a0] sm:$0xff] %v787
  %796 = vst [vmem:[#allocation2 + $0x1a8] sm:$0xff] %v788
  %797 = vst [vmem:[#allocation2 + $0x1b0] sm:$0xff] %v789
  %798 = vst [vmem:[#allocation2 + $0x1b8] sm:$0xff] %v790
  %799 = vrot.lane.b32.xlu0 %v187, 112
  %v800 = vpop.permute.xlu0 %799
  %801 = vrot.lane.b32.xlu0 %v191, 112
  %v802 = vpop.permute.xlu0 %801
  %803 = vrot.lane.b32.xlu0 %v195, 112
  %v804 = vpop.permute.xlu0 %803
  %805 = vrot.lane.b32.xlu0 %v199, 112
  %v806 = vpop.permute.xlu0 %805
  %807 = vrot.lane.b32.xlu0 %v188, 112
  %v808 = vpop.permute.xlu0 %807
  %809 = vrot.lane.b32.xlu0 %v192, 112
  %v810 = vpop.permute.xlu0 %809
  %811 = vrot.lane.b32.xlu0 %v196, 112
  %v812 = vpop.permute.xlu0 %811
  %813 = vrot.lane.b32.xlu0 %v200, 112
  %v814 = vpop.permute.xlu0 %813
  %815 = vrot.lane.b32.xlu0 %v189, 112
  %v816 = vpop.permute.xlu0 %815
  %817 = vrot.lane.b32.xlu0 %v193, 112
  %v818 = vpop.permute.xlu0 %817
  %819 = vrot.lane.b32.xlu0 %v197, 112
  %v820 = vpop.permute.xlu0 %819
  %821 = vrot.lane.b32.xlu0 %v201, 112
  %v822 = vpop.permute.xlu0 %821
  %823 = vrot.lane.b32.xlu0 %v190, 112
  %v824 = vpop.permute.xlu0 %823
  %825 = vrot.lane.b32.xlu0 %v194, 112
  %v826 = vpop.permute.xlu0 %825
  %827 = vrot.lane.b32.xlu0 %v198, 112
  %v828 = vpop.permute.xlu0 %827
  %829 = vrot.lane.b32.xlu0 %v202, 112
  %v830 = vpop.permute.xlu0 %829
  %vm831 = vcmp.lt.s32.totalorder %v236, 112
  %v832 = vsel %vm831, %v816, %v824
  %v833 = vsel %vm831, %v818, %v826
  %v834 = vsel %vm831, %v820, %v828
  %v835 = vsel %vm831, %v822, %v830
  %v836 = vsel %vm831, %v808, %v816
  %v837 = vsel %vm831, %v810, %v818
  %v838 = vsel %vm831, %v812, %v820
  %v839 = vsel %vm831, %v814, %v822
  %v840 = vsel %vm831, %v800, %v808
  %v841 = vsel %vm831, %v802, %v810
  %v842 = vsel %vm831, %v804, %v812
  %v843 = vsel %vm831, %v806, %v814
  %v844 = vsel %vm831, %v824, %v800
  %v845 = vsel %vm831, %v826, %v802
  %v846 = vsel %vm831, %v828, %v804
  %v847 = vsel %vm831, %v830, %v806
  %s848 = scalar_lea.vmem %s1, 7
  %v849 = vld [vmem:[%s848] ss:$8 sm:$0xf]
  %v851 = vperm.slane %v849, 0
  %v852 = vperm.slane %v849, 1
  %v853 = vperm.slane %v849, 2
  %v854 = vperm.slane %v849, 3
  %v859 = vmul.f32 %v840, %v851
  %v860 = vmul.f32 %v836, %v852
  %v861 = vmul.f32 %v832, %v853
  %v862 = vmul.f32 %v844, %v854
  %v863 = vmul.f32 %v841, %v851
  %v864 = vmul.f32 %v837, %v852
  %v865 = vmul.f32 %v833, %v853
  %v866 = vmul.f32 %v845, %v854
  %v867 = vmul.f32 %v842, %v851
  %v868 = vmul.f32 %v838, %v852
  %v869 = vmul.f32 %v834, %v853
  %v870 = vmul.f32 %v846, %v854
  %v871 = vmul.f32 %v843, %v851
  %v872 = vmul.f32 %v839, %v852
  %v873 = vmul.f32 %v835, %v853
  %v874 = vmul.f32 %v847, %v854
  %v875 = vpack.c.bf16 %v860, %v859
  %v876 = vpack.c.bf16 %v862, %v861
  %v877 = vpack.c.bf16 %v864, %v863
  %v878 = vpack.c.bf16 %v866, %v865
  %v879 = vpack.c.bf16 %v868, %v867
  %v880 = vpack.c.bf16 %v870, %v869
  %v881 = vpack.c.bf16 %v872, %v871
  %v882 = vpack.c.bf16 %v874, %v873
  %883 = vst [vmem:[#allocation2 + $0x1c0] sm:$0xff] %v875
  %884 = vst [vmem:[#allocation2 + $0x1c8] sm:$0xff] %v876
  %885 = vst [vmem:[#allocation2 + $0x1d0] sm:$0xff] %v877
  %886 = vst [vmem:[#allocation2 + $0x1d8] sm:$0xff] %v878
  %887 = vst [vmem:[#allocation2 + $0x1e0] sm:$0xff] %v879
  %888 = vst [vmem:[#allocation2 + $0x1e8] sm:$0xff] %v880
  %889 = vst [vmem:[#allocation2 + $0x1f0] sm:$0xff] %v881
  %890 = vst [vmem:[#allocation2 + $0x1f8] sm:$0xff] %v882
  %891 = vrot.lane.b32.xlu0 %v187, 111
  %v892 = vpop.permute.xlu0 %891
  %893 = vrot.lane.b32.xlu0 %v191, 111
  %v894 = vpop.permute.xlu0 %893
  %895 = vrot.lane.b32.xlu0 %v195, 111
  %v896 = vpop.permute.xlu0 %895
  %897 = vrot.lane.b32.xlu0 %v199, 111
  %v898 = vpop.permute.xlu0 %897
  %899 = vrot.lane.b32.xlu0 %v188, 111
  %v900 = vpop.permute.xlu0 %899
  %901 = vrot.lane.b32.xlu0 %v192, 111
  %v902 = vpop.permute.xlu0 %901
  %903 = vrot.lane.b32.xlu0 %v196, 111
  %v904 = vpop.permute.xlu0 %903
  %905 = vrot.lane.b32.xlu0 %v200, 111
  %v906 = vpop.permute.xlu0 %905
  %907 = vrot.lane.b32.xlu0 %v189, 111
  %v908 = vpop.permute.xlu0 %907
  %909 = vrot.lane.b32.xlu0 %v193, 111
  %v910 = vpop.permute.xlu0 %909
  %911 = vrot.lane.b32.xlu0 %v197, 111
  %v912 = vpop.permute.xlu0 %911
  %913 = vrot.lane.b32.xlu0 %v201, 111
  %v914 = vpop.permute.xlu0 %913
  %915 = vrot.lane.b32.xlu0 %v190, 111
  %v916 = vpop.permute.xlu0 %915
  %917 = vrot.lane.b32.xlu0 %v194, 111
  %v918 = vpop.permute.xlu0 %917
  %919 = vrot.lane.b32.xlu0 %v198, 111
  %v920 = vpop.permute.xlu0 %919
  %921 = vrot.lane.b32.xlu0 %v202, 111
  %v922 = vpop.permute.xlu0 %921
  %vm923 = vcmp.lt.s32.totalorder %v236, 111
  %v924 = vsel %vm923, %v908, %v916
  %v925 = vsel %vm923, %v910, %v918
  %v926 = vsel %vm923, %v912, %v920
  %v927 = vsel %vm923, %v914, %v922
  %v928 = vsel %vm923, %v900, %v908
  %v929 = vsel %vm923, %v902, %v910
  %v930 = vsel %vm923, %v904, %v912
  %v931 = vsel %vm923, %v906, %v914
  %v932 = vsel %vm923, %v892, %v900
  %v933 = vsel %vm923, %v894, %v902
  %v934 = vsel %vm923, %v896, %v904
  %v935 = vsel %vm923, %v898, %v906
  %v936 = vsel %vm923, %v916, %v892
  %v937 = vsel %vm923, %v918, %v894
  %v938 = vsel %vm923, %v920, %v896
  %v939 = vsel %vm923, %v922, %v898
  %s940 = scalar_lea.vmem %s1, 32
  %v941 = vld [vmem:[%s940] ss:$8 sm:$0xf]
  %v943 = vperm.slane %v941, 0
  %v944 = vperm.slane %v941, 1
  %v945 = vperm.slane %v941, 2
  %v946 = vperm.slane %v941, 3
  %v951 = vmul.f32 %v932, %v943
  %v952 = vmul.f32 %v928, %v944
  %v953 = vmul.f32 %v924, %v945
  %v954 = vmul.f32 %v936, %v946
  %v955 = vmul.f32 %v933, %v943
  %v956 = vmul.f32 %v929, %v944
  %v957 = vmul.f32 %v925, %v945
  %v958 = vmul.f32 %v937, %v946
  %v959 = vmul.f32 %v934, %v943
  %v960 = vmul.f32 %v930, %v944
  %v961 = vmul.f32 %v926, %v945
  %v962 = vmul.f32 %v938, %v946
  %v963 = vmul.f32 %v935, %v943
  %v964 = vmul.f32 %v931, %v944
  %v965 = vmul.f32 %v927, %v945
  %v966 = vmul.f32 %v939, %v946
  %v967 = vpack.c.bf16 %v952, %v951
  %v968 = vpack.c.bf16 %v954, %v953
  %v969 = vpack.c.bf16 %v956, %v955
  %v970 = vpack.c.bf16 %v958, %v957
  %v971 = vpack.c.bf16 %v960, %v959
  %v972 = vpack.c.bf16 %v962, %v961
  %v973 = vpack.c.bf16 %v964, %v963
  %v974 = vpack.c.bf16 %v966, %v965
  %975 = vst [vmem:[#allocation2 + $0x200] sm:$0xff] %v967
  %976 = vst [vmem:[#allocation2 + $0x208] sm:$0xff] %v968
  %977 = vst [vmem:[#allocation2 + $0x210] sm:$0xff] %v969
  %978 = vst [vmem:[#allocation2 + $0x218] sm:$0xff] %v970
  %979 = vst [vmem:[#allocation2 + $0x220] sm:$0xff] %v971
  %980 = vst [vmem:[#allocation2 + $0x228] sm:$0xff] %v972
  %981 = vst [vmem:[#allocation2 + $0x230] sm:$0xff] %v973
  %982 = vst [vmem:[#allocation2 + $0x238] sm:$0xff] %v974
  %v983 = vld [vmem:[%s4] sm:$0xff]
  %v984 = vld [vmem:[%s4 + $0x8] sm:$0xf]
  %v985 = vld [vmem:[%s4 + $0xc] sm:$0xff]
  %v986 = vld [vmem:[%s4 + $0x14] sm:$0xf]
  %v987 = vld [vmem:[%s4 + $0x18] sm:$0xff]
  %v988 = vld [vmem:[%s4 + $0x20] sm:$0xf]
  %v989 = vld [vmem:[%s4 + $0x24] sm:$0xff]
  %v990 = vld [vmem:[%s4 + $0x2c] sm:$0xf]
  %v991 = vld [vmem:[%s4 + $0x30] sm:$0xff]
  %v992 = vld [vmem:[%s4 + $0x38] sm:$0xf]
  %v993 = vld [vmem:[%s4 + $0x3c] sm:$0xff]
  %v994 = vld [vmem:[%s4 + $0x44] sm:$0xf]
  %v995 = vld [vmem:[%s4 + $0x48] sm:$0xff]
  %v996 = vld [vmem:[%s4 + $0x50] sm:$0xf]
  %v997 = vld [vmem:[%s4 + $0x54] sm:$0xff]
  %v998 = vld [vmem:[%s4 + $0x5c] sm:$0xf]
  %v999 = vld [vmem:[#allocation2] sm:$0xff]
  %v1000 = vld [vmem:[#allocation2 + $0x8] sm:$0xff]
  %v1001 = vld [vmem:[#allocation2 + $0x10] sm:$0xff]
  %v1002 = vld [vmem:[#allocation2 + $0x18] sm:$0xff]
  %v1003 = vld [vmem:[#allocation2 + $0x20] sm:$0xff]
  %v1004 = vld [vmem:[#allocation2 + $0x28] sm:$0xff]
  %v1005 = vld [vmem:[#allocation2 + $0x30] sm:$0xff]
  %v1006 = vld [vmem:[#allocation2 + $0x38] sm:$0xff]
  %v1007 = vld [vmem:[#allocation2 + $0x40] sm:$0xff]
  %v1008 = vld [vmem:[#allocation2 + $0x48] sm:$0xff]
  %v1009 = vld [vmem:[#allocation2 + $0x50] sm:$0xff]
  %v1010 = vld [vmem:[#allocation2 + $0x58] sm:$0xff]
  %v1011 = vld [vmem:[#allocation2 + $0x60] sm:$0xff]
  %v1012 = vld [vmem:[#allocation2 + $0x68] sm:$0xff]
  %v1013 = vld [vmem:[#allocation2 + $0x70] sm:$0xff]
  %v1014 = vld [vmem:[#allocation2 + $0x78] sm:$0xff]
  %v1015 = vld [vmem:[#allocation2 + $0x80] sm:$0xff]
  %v1016 = vld [vmem:[#allocation2 + $0x88] sm:$0xff]
  %v1017 = vld [vmem:[#allocation2 + $0x90] sm:$0xff]
  %v1018 = vld [vmem:[#allocation2 + $0x98] sm:$0xff]
  %v1019 = vld [vmem:[#allocation2 + $0xa0] sm:$0xff]
  %v1020 = vld [vmem:[#allocation2 + $0xa8] sm:$0xff]
  %v1021 = vld [vmem:[#allocation2 + $0xb0] sm:$0xff]
  %v1022 = vld [vmem:[#allocation2 + $0xb8] sm:$0xff]
  %v1023 = vld [vmem:[#allocation2 + $0xc0] sm:$0xff]
  %v1024 = vld [vmem:[#allocation2 + $0xc8] sm:$0xff]
  %v1025 = vld [vmem:[#allocation2 + $0xd0] sm:$0xff]
  %v1026 = vld [vmem:[#allocation2 + $0xd8] sm:$0xff]
  %v1027 = vld [vmem:[#allocation2 + $0xe0] sm:$0xff]
  %v1028 = vld [vmem:[#allocation2 + $0xe8] sm:$0xff]
  %v1029 = vld [vmem:[#allocation2 + $0xf0] sm:$0xff]
  %v1030 = vld [vmem:[#allocation2 + $0xf8] sm:$0xff]
  %v1031 = vld [vmem:[#allocation2 + $0x100] sm:$0xff]
  %v1032 = vld [vmem:[#allocation2 + $0x108] sm:$0xff]
  %v1033 = vld [vmem:[#allocation2 + $0x110] sm:$0xff]
  %v1034 = vld [vmem:[#allocation2 + $0x118] sm:$0xff]
  %v1035 = vld [vmem:[#allocation2 + $0x120] sm:$0xff]
  %v1036 = vld [vmem:[#allocation2 + $0x128] sm:$0xff]
  %v1037 = vld [vmem:[#allocation2 + $0x130] sm:$0xff]
  %v1038 = vld [vmem:[#allocation2 + $0x138] sm:$0xff]
  %v1039 = vld [vmem:[#allocation2 + $0x140] sm:$0xff]
  %v1040 = vld [vmem:[#allocation2 + $0x148] sm:$0xff]
  %v1041 = vld [vmem:[#allocation2 + $0x150] sm:$0xff]
  %v1042 = vld [vmem:[#allocation2 + $0x158] sm:$0xff]
  %v1043 = vld [vmem:[#allocation2 + $0x160] sm:$0xff]
  %v1044 = vld [vmem:[#allocation2 + $0x168] sm:$0xff]
  %v1045 = vld [vmem:[#allocation2 + $0x170] sm:$0xff]
  %v1046 = vld [vmem:[#allocation2 + $0x178] sm:$0xff]
  %v1047 = vld [vmem:[#allocation2 + $0x180] sm:$0xff]
  %v1048 = vld [vmem:[#allocation2 + $0x188] sm:$0xff]
  %v1049 = vld [vmem:[#allocation2 + $0x190] sm:$0xff]
  %v1050 = vld [vmem:[#allocation2 + $0x198] sm:$0xff]
  %v1051 = vld [vmem:[#allocation2 + $0x1a0] sm:$0xff]
  %v1052 = vld [vmem:[#allocation2 + $0x1a8] sm:$0xff]
  %v1053 = vld [vmem:[#allocation2 + $0x1b0] sm:$0xff]
  %v1054 = vld [vmem:[#allocation2 + $0x1b8] sm:$0xff]
  %v1055 = vld [vmem:[#allocation2 + $0x1c0] sm:$0xff]
  %v1056 = vld [vmem:[#allocation2 + $0x1c8] sm:$0xff]
  %v1057 = vld [vmem:[#allocation2 + $0x1d0] sm:$0xff]
  %v1058 = vld [vmem:[#allocation2 + $0x1d8] sm:$0xff]
  %v1059 = vld [vmem:[#allocation2 + $0x1e0] sm:$0xff]
  %v1060 = vld [vmem:[#allocation2 + $0x1e8] sm:$0xff]
  %v1061 = vld [vmem:[#allocation2 + $0x1f0] sm:$0xff]
  %v1062 = vld [vmem:[#allocation2 + $0x1f8] sm:$0xff]
  %v1063 = vld [vmem:[#allocation2 + $0x200] sm:$0xff]
  %v1064 = vld [vmem:[#allocation2 + $0x208] sm:$0xff]
  %v1065 = vld [vmem:[#allocation2 + $0x210] sm:$0xff]
  %v1066 = vld [vmem:[#allocation2 + $0x218] sm:$0xff]
  %v1067 = vld [vmem:[#allocation2 + $0x220] sm:$0xff]
  %v1068 = vld [vmem:[#allocation2 + $0x228] sm:$0xff]
  %v1069 = vld [vmem:[#allocation2 + $0x230] sm:$0xff]
  %v1070 = vld [vmem:[#allocation2 + $0x238] sm:$0xff]
  %v1071 = vld [vmem:[%s5] sm:$0xff]
  %v1072 = vld [vmem:[%s5 + $0x8] sm:$0xff]
  %v1073 = vld [vmem:[%s5 + $0x10] sm:$0xff]
  %v1074 = vld [vmem:[%s5 + $0x18] sm:$0xff]
  %v1075 = vld [vmem:[%s5 + $0x20] sm:$0xff]
  %v1076 = vld [vmem:[%s5 + $0x28] sm:$0xff]
  %v1077 = vld [vmem:[%s5 + $0x30] sm:$0xff]
  %v1078 = vld [vmem:[%s5 + $0x38] sm:$0xff]
  %1080 = vset.pattern.permute.xlu0 0
  %1081 = vperm.xlu0 %1080, %v1071
  %v1082 = vpop.permute.xlu0 %1081
  %1085 = vset.pattern.permute.xlu0 0
  %1086 = vperm.xlu0 %1085, %v1072
  %v1087 = vpop.permute.xlu0 %1086
  %1090 = vset.pattern.permute.xlu0 0
  %1091 = vperm.xlu0 %1090, %v1073
  %v1092 = vpop.permute.xlu0 %1091
  %1095 = vset.pattern.permute.xlu0 0
  %1096 = vperm.xlu0 %1095, %v1074
  %v1097 = vpop.permute.xlu0 %1096
  %1100 = vset.pattern.permute.xlu0 0
  %1101 = vperm.xlu0 %1100, %v1075
  %v1102 = vpop.permute.xlu0 %1101
  %1105 = vset.pattern.permute.xlu0 0
  %1106 = vperm.xlu0 %1105, %v1076
  %v1107 = vpop.permute.xlu0 %1106
  %1110 = vset.pattern.permute.xlu0 0
  %1111 = vperm.xlu0 %1110, %v1077
  %v1112 = vpop.permute.xlu0 %1111
  %1115 = vset.pattern.permute.xlu0 0
  %1116 = vperm.xlu0 %1115, %v1078
  %v1117 = vpop.permute.xlu0 %1116
  %v1135 = vunpack.c.l.b16 %v983
  %v1136 = vunpack.c.h.b16 %v983
  %v1137 = vunpack.c.l.b16 %v984
  %v1138 = vunpack.c.l.b16 %v985
  %v1139 = vunpack.c.h.b16 %v985
  %v1140 = vunpack.c.l.b16 %v986
  %v1141 = vunpack.c.l.b16 %v987
  %v1142 = vunpack.c.h.b16 %v987
  %v1143 = vunpack.c.l.b16 %v988
  %v1144 = vunpack.c.l.b16 %v989
  %v1145 = vunpack.c.h.b16 %v989
  %v1146 = vunpack.c.l.b16 %v990
  %v1147 = vunpack.c.l.b16 %v991
  %v1148 = vunpack.c.h.b16 %v991
  %v1149 = vunpack.c.l.b16 %v992
  %v1150 = vunpack.c.l.b16 %v993
  %v1151 = vunpack.c.h.b16 %v993
  %v1152 = vunpack.c.l.b16 %v994
  %v1153 = vunpack.c.l.b16 %v995
  %v1154 = vunpack.c.h.b16 %v995
  %v1155 = vunpack.c.l.b16 %v996
  %v1156 = vunpack.c.l.b16 %v997
  %v1157 = vunpack.c.h.b16 %v997
  %v1158 = vunpack.c.l.b16 %v998
  %v1159 = vpack.c.b16 %v1138, %v1135
  %v1160 = vpack.c.b16 %v1139, %v1136
  %v1161 = vpack.c.b16 %v1140, %v1137
  %v1162 = vpack.c.b16 %v1144, %v1141
  %v1163 = vpack.c.b16 %v1145, %v1142
  %v1164 = vpack.c.b16 %v1146, %v1143
  %v1165 = vpack.c.b16 %v1150, %v1147
  %v1166 = vpack.c.b16 %v1151, %v1148
  %v1167 = vpack.c.b16 %v1152, %v1149
  %v1168 = vpack.c.b16 %v1156, %v1153
  %v1169 = vpack.c.b16 %v1157, %v1154
  %v1170 = vpack.c.b16 %v1158, %v1155
  %v1251 = vunpack.c.l.b16 %v999
  %v1252 = vunpack.c.h.b16 %v999
  %v1253 = vunpack.c.l.b16 %v1000
  %v1254 = vunpack.c.h.b16 %v1000
  %v1255 = vunpack.c.l.b16 %v1001
  %v1256 = vunpack.c.h.b16 %v1001
  %v1257 = vunpack.c.l.b16 %v1002
  %v1258 = vunpack.c.h.b16 %v1002
  %v1259 = vunpack.c.l.b16 %v1003
  %v1260 = vunpack.c.h.b16 %v1003
  %v1261 = vunpack.c.l.b16 %v1004
  %v1262 = vunpack.c.h.b16 %v1004
  %v1263 = vunpack.c.l.b16 %v1005
  %v1264 = vunpack.c.h.b16 %v1005
  %v1265 = vunpack.c.l.b16 %v1006
  %v1266 = vunpack.c.h.b16 %v1006
  %v1267 = vunpack.c.l.b16 %v1007
  %v1268 = vunpack.c.h.b16 %v1007
  %v1269 = vunpack.c.l.b16 %v1008
  %v1270 = vunpack.c.h.b16 %v1008
  %v1271 = vunpack.c.l.b16 %v1009
  %v1272 = vunpack.c.h.b16 %v1009
  %v1273 = vunpack.c.l.b16 %v1010
  %v1274 = vunpack.c.h.b16 %v1010
  %v1275 = vunpack.c.l.b16 %v1011
  %v1276 = vunpack.c.h.b16 %v1011
  %v1277 = vunpack.c.l.b16 %v1012
  %v1278 = vunpack.c.h.b16 %v1012
  %v1279 = vunpack.c.l.b16 %v1013
  %v1280 = vunpack.c.h.b16 %v1013
  %v1281 = vunpack.c.l.b16 %v1014
  %v1282 = vunpack.c.h.b16 %v1014
  %v1283 = vunpack.c.l.b16 %v1015
  %v1284 = vunpack.c.h.b16 %v1015
  %v1285 = vunpack.c.l.b16 %v1016
  %v1286 = vunpack.c.h.b16 %v1016
  %v1287 = vunpack.c.l.b16 %v1017
  %v1288 = vunpack.c.h.b16 %v1017
  %v1289 = vunpack.c.l.b16 %v1018
  %v1290 = vunpack.c.h.b16 %v1018
  %v1291 = vunpack.c.l.b16 %v1019
  %v1292 = vunpack.c.h.b16 %v1019
  %v1293 = vunpack.c.l.b16 %v1020
  %v1294 = vunpack.c.h.b16 %v1020
  %v1295 = vunpack.c.l.b16 %v1021
  %v1296 = vunpack.c.h.b16 %v1021
  %v1297 = vunpack.c.l.b16 %v1022
  %v1298 = vunpack.c.h.b16 %v1022
  %v1299 = vunpack.c.l.b16 %v1023
  %v1300 = vunpack.c.h.b16 %v1023
  %v1301 = vunpack.c.l.b16 %v1024
  %v1302 = vunpack.c.h.b16 %v1024
  %v1303 = vunpack.c.l.b16 %v1025
  %v1304 = vunpack.c.h.b16 %v1025
  %v1305 = vunpack.c.l.b16 %v1026
  %v1306 = vunpack.c.h.b16 %v1026
  %v1307 = vunpack.c.l.b16 %v1027
  %v1308 = vunpack.c.h.b16 %v1027
  %v1309 = vunpack.c.l.b16 %v1028
  %v1310 = vunpack.c.h.b16 %v1028
  %v1311 = vunpack.c.l.b16 %v1029
  %v1312 = vunpack.c.h.b16 %v1029
  %v1313 = vunpack.c.l.b16 %v1030
  %v1314 = vunpack.c.h.b16 %v1030
  %v1315 = vunpack.c.l.b16 %v1031
  %v1316 = vunpack.c.h.b16 %v1031
  %v1317 = vunpack.c.l.b16 %v1032
  %v1318 = vunpack.c.h.b16 %v1032
  %v1319 = vunpack.c.l.b16 %v1033
  %v1320 = vunpack.c.h.b16 %v1033
  %v1321 = vunpack.c.l.b16 %v1034
  %v1322 = vunpack.c.h.b16 %v1034
  %v1323 = vunpack.c.l.b16 %v1035
  %v1324 = vunpack.c.h.b16 %v1035
  %v1325 = vunpack.c.l.b16 %v1036
  %v1326 = vunpack.c.h.b16 %v1036
  %v1327 = vunpack.c.l.b16 %v1037
  %v1328 = vunpack.c.h.b16 %v1037
  %v1329 = vunpack.c.l.b16 %v1038
  %v1330 = vunpack.c.h.b16 %v1038
  %v1331 = vunpack.c.l.b16 %v1039
  %v1332 = vunpack.c.h.b16 %v1039
  %v1333 = vunpack.c.l.b16 %v1040
  %v1334 = vunpack.c.h.b16 %v1040
  %v1335 = vunpack.c.l.b16 %v1041
  %v1336 = vunpack.c.h.b16 %v1041
  %v1337 = vunpack.c.l.b16 %v1042
  %v1338 = vunpack.c.h.b16 %v1042
  %v1339 = vunpack.c.l.b16 %v1043
  %v1340 = vunpack.c.h.b16 %v1043
  %v1341 = vunpack.c.l.b16 %v1044
  %v1342 = vunpack.c.h.b16 %v1044
  %v1343 = vunpack.c.l.b16 %v1045
  %v1344 = vunpack.c.h.b16 %v1045
  %v1345 = vunpack.c.l.b16 %v1046
  %v1346 = vunpack.c.h.b16 %v1046
  %v1347 = vunpack.c.l.b16 %v1047
  %v1348 = vunpack.c.h.b16 %v1047
  %v1349 = vunpack.c.l.b16 %v1048
  %v1350 = vunpack.c.h.b16 %v1048
  %v1351 = vunpack.c.l.b16 %v1049
  %v1352 = vunpack.c.h.b16 %v1049
  %v1353 = vunpack.c.l.b16 %v1050
  %v1354 = vunpack.c.h.b16 %v1050
  %v1355 = vunpack.c.l.b16 %v1051
  %v1356 = vunpack.c.h.b16 %v1051
  %v1357 = vunpack.c.l.b16 %v1052
  %v1358 = vunpack.c.h.b16 %v1052
  %v1359 = vunpack.c.l.b16 %v1053
  %v1360 = vunpack.c.h.b16 %v1053
  %v1361 = vunpack.c.l.b16 %v1054
  %v1362 = vunpack.c.h.b16 %v1054
  %v1363 = vunpack.c.l.b16 %v1055
  %v1364 = vunpack.c.h.b16 %v1055
  %v1365 = vunpack.c.l.b16 %v1056
  %v1366 = vunpack.c.h.b16 %v1056
  %v1367 = vunpack.c.l.b16 %v1057
  %v1368 = vunpack.c.h.b16 %v1057
  %v1369 = vunpack.c.l.b16 %v1058
  %v1370 = vunpack.c.h.b16 %v1058
  %v1371 = vunpack.c.l.b16 %v1059
  %v1372 = vunpack.c.h.b16 %v1059
  %v1373 = vunpack.c.l.b16 %v1060
  %v1374 = vunpack.c.h.b16 %v1060
  %v1375 = vunpack.c.l.b16 %v1061
  %v1376 = vunpack.c.h.b16 %v1061
  %v1377 = vunpack.c.l.b16 %v1062
  %v1378 = vunpack.c.h.b16 %v1062
  %v1379 = vunpack.c.l.b16 %v1063
  %v1380 = vunpack.c.h.b16 %v1063
  %v1381 = vunpack.c.l.b16 %v1064
  %v1382 = vunpack.c.h.b16 %v1064
  %v1383 = vunpack.c.l.b16 %v1065
  %v1384 = vunpack.c.h.b16 %v1065
  %v1385 = vunpack.c.l.b16 %v1066
  %v1386 = vunpack.c.h.b16 %v1066
  %v1387 = vunpack.c.l.b16 %v1067
  %v1388 = vunpack.c.h.b16 %v1067
  %v1389 = vunpack.c.l.b16 %v1068
  %v1390 = vunpack.c.h.b16 %v1068
  %v1391 = vunpack.c.l.b16 %v1069
  %v1392 = vunpack.c.h.b16 %v1069
  %v1393 = vunpack.c.l.b16 %v1070
  %v1394 = vunpack.c.h.b16 %v1070
  %v1395 = vpack.c.b16 %v1255, %v1251
  %v1396 = vpack.c.b16 %v1256, %v1252
  %v1397 = vpack.c.b16 %v1257, %v1253
  %v1398 = vpack.c.b16 %v1258, %v1254
  %v1399 = vpack.c.b16 %v1263, %v1259
  %v1400 = vpack.c.b16 %v1264, %v1260
  %v1401 = vpack.c.b16 %v1265, %v1261
  %v1402 = vpack.c.b16 %v1266, %v1262
  %v1403 = vpack.c.b16 %v1271, %v1267
  %v1404 = vpack.c.b16 %v1272, %v1268
  %v1405 = vpack.c.b16 %v1273, %v1269
  %v1406 = vpack.c.b16 %v1274, %v1270
  %v1407 = vpack.c.b16 %v1279, %v1275
  %v1408 = vpack.c.b16 %v1280, %v1276
  %v1409 = vpack.c.b16 %v1281, %v1277
  %v1410 = vpack.c.b16 %v1282, %v1278
  %v1411 = vpack.c.b16 %v1287, %v1283
  %v1412 = vpack.c.b16 %v1288, %v1284
  %v1413 = vpack.c.b16 %v1289, %v1285
  %v1414 = vpack.c.b16 %v1290, %v1286
  %v1415 = vpack.c.b16 %v1295, %v1291
  %v1416 = vpack.c.b16 %v1296, %v1292
  %v1417 = vpack.c.b16 %v1297, %v1293
  %v1418 = vpack.c.b16 %v1298, %v1294
  %v1419 = vpack.c.b16 %v1303, %v1299
  %v1420 = vpack.c.b16 %v1304, %v1300
  %v1421 = vpack.c.b16 %v1305, %v1301
  %v1422 = vpack.c.b16 %v1306, %v1302
  %v1423 = vpack.c.b16 %v1311, %v1307
  %v1424 = vpack.c.b16 %v1312, %v1308
  %v1425 = vpack.c.b16 %v1313, %v1309
  %v1426 = vpack.c.b16 %v1314, %v1310
  %v1427 = vpack.c.b16 %v1319, %v1315
  %v1428 = vpack.c.b16 %v1320, %v1316
  %v1429 = vpack.c.b16 %v1321, %v1317
  %v1430 = vpack.c.b16 %v1322, %v1318
  %v1431 = vpack.c.b16 %v1327, %v1323
  %v1432 = vpack.c.b16 %v1328, %v1324
  %v1433 = vpack.c.b16 %v1329, %v1325
  %v1434 = vpack.c.b16 %v1330, %v1326
  %v1435 = vpack.c.b16 %v1335, %v1331
  %v1436 = vpack.c.b16 %v1336, %v1332
  %v1437 = vpack.c.b16 %v1337, %v1333
  %v1438 = vpack.c.b16 %v1338, %v1334
  %v1439 = vpack.c.b16 %v1343, %v1339
  %v1440 = vpack.c.b16 %v1344, %v1340
  %v1441 = vpack.c.b16 %v1345, %v1341
  %v1442 = vpack.c.b16 %v1346, %v1342
  %v1443 = vpack.c.b16 %v1351, %v1347
  %v1444 = vpack.c.b16 %v1352, %v1348
  %v1445 = vpack.c.b16 %v1353, %v1349
  %v1446 = vpack.c.b16 %v1354, %v1350
  %v1447 = vpack.c.b16 %v1359, %v1355
  %v1448 = vpack.c.b16 %v1360, %v1356
  %v1449 = vpack.c.b16 %v1361, %v1357
  %v1450 = vpack.c.b16 %v1362, %v1358
  %v1451 = vpack.c.b16 %v1367, %v1363
  %v1452 = vpack.c.b16 %v1368, %v1364
  %v1453 = vpack.c.b16 %v1369, %v1365
  %v1454 = vpack.c.b16 %v1370, %v1366
  %v1455 = vpack.c.b16 %v1375, %v1371
  %v1456 = vpack.c.b16 %v1376, %v1372
  %v1457 = vpack.c.b16 %v1377, %v1373
  %v1458 = vpack.c.b16 %v1378, %v1374
  %v1459 = vpack.c.b16 %v1383, %v1379
  %v1460 = vpack.c.b16 %v1384, %v1380
  %v1461 = vpack.c.b16 %v1385, %v1381
  %v1462 = vpack.c.b16 %v1386, %v1382
  %v1463 = vpack.c.b16 %v1391, %v1387
  %v1464 = vpack.c.b16 %v1392, %v1388
  %v1465 = vpack.c.b16 %v1393, %v1389
  %v1466 = vpack.c.b16 %v1394, %v1390
  %vm1539 = vcmask 261120
  %v1541 = vsel %vm1539, %v1161, 0
  %v1544 = vsel %vm1539, %v1164, 0
  %v1547 = vsel %vm1539, %v1167, 0
  %v1550 = vsel %vm1539, %v1170, 0
  %1552 = vmatpush.bf16.msra.mxu0 %v1423
  %1553 = vmatpush.bf16.msra.mxu0 %v1419
  %1554 = vmatpush.bf16.msra.mxu0 %v1415
  %1555 = vmatpush.bf16.msra.mxu0 %v1411
  %1556 = vmatpush.bf16.msra.mxu0 %v1407
  %1557 = vmatpush.bf16.msra.mxu0 %v1403
  %1558 = vmatpush.bf16.msra.mxu0 %v1399
  %1559 = vmatpush.bf16.msra.mxu0 %v1395
  %1560 = vmatmul.bf16.gmra.mxu0 %v1159
  %v1561 = vpop.f32.mrf.mxu0
  %v1562 = vadd.f32 %v1082, %v1561
  %v1563 = vpop.f32.mrf.mxu0
  %v1564 = vadd.f32 %v1087, %v1563
  %1565 = vmatmul.bf16.gmra.mxu0 %v1162
  %v1566 = vpop.f32.mrf.mxu0
  %v1567 = vadd.f32 %v1092, %v1566
  %v1568 = vpop.f32.mrf.mxu0
  %v1569 = vadd.f32 %v1097, %v1568
  %1570 = vmatmul.bf16.gmra.mxu0 %v1165
  %v1571 = vpop.f32.mrf.mxu0
  %v1572 = vadd.f32 %v1102, %v1571
  %v1573 = vpop.f32.mrf.mxu0
  %v1574 = vadd.f32 %v1107, %v1573
  %1575 = vmatmul.bf16.gmra.mxu0 %v1168
  %v1576 = vpop.f32.mrf.mxu0
  %v1577 = vadd.f32 %v1112, %v1576
  %v1578 = vpop.f32.mrf.mxu0
  %v1579 = vadd.f32 %v1117, %v1578
  %1580 = vdwg.mxu0
  %1581 = vmatpush.bf16.msra.mxu0 %v1455
  %1582 = vmatpush.bf16.msra.mxu0 %v1451
  %1583 = vmatpush.bf16.msra.mxu0 %v1447
  %1584 = vmatpush.bf16.msra.mxu0 %v1443
  %1585 = vmatpush.bf16.msra.mxu0 %v1439
  %1586 = vmatpush.bf16.msra.mxu0 %v1435
  %1587 = vmatpush.bf16.msra.mxu0 %v1431
  %1588 = vmatpush.bf16.msra.mxu0 %v1427
  %1589 = vmatmul.bf16.gmra.mxu0 %v1160
  %v1590 = vpop.f32.mrf.mxu0
  %v1591 = vadd.f32 %v1562, %v1590
  %v1592 = vpop.f32.mrf.mxu0
  %v1593 = vadd.f32 %v1564, %v1592
  %1594 = vmatmul.bf16.gmra.mxu0 %v1163
  %v1595 = vpop.f32.mrf.mxu0
  %v1596 = vadd.f32 %v1567, %v1595
  %v1597 = vpop.f32.mrf.mxu0
  %v1598 = vadd.f32 %v1569, %v1597
  %1599 = vmatmul.bf16.gmra.mxu0 %v1166
  %v1600 = vpop.f32.mrf.mxu0
  %v1601 = vadd.f32 %v1572, %v1600
  %v1602 = vpop.f32.mrf.mxu0
  %v1603 = vadd.f32 %v1574, %v1602
  %1604 = vmatmul.bf16.gmra.mxu0 %v1169
  %v1605 = vpop.f32.mrf.mxu0
  %v1606 = vadd.f32 %v1577, %v1605
  %v1607 = vpop.f32.mrf.mxu0
  %v1608 = vadd.f32 %v1579, %v1607
  %1609 = vdwg.mxu0
  %1610 = vmatpush.bf16.msra.mxu0 0
  %1611 = vmatpush.bf16.msra.mxu0 0
  %1612 = vmatpush.bf16.msra.mxu0 0
  %1613 = vmatpush.bf16.msra.mxu0 0
  %1614 = vmatpush.bf16.msra.mxu0 0
  %1615 = vmatpush.bf16.msra.mxu0 0
  %1616 = vmatpush.bf16.msra.mxu0 %v1463
  %1617 = vmatpush.bf16.msra.mxu0 %v1459
  %1618 = vmatmul.bf16.gmra.mxu0 %v1541
  %v1619 = vpop.f32.mrf.mxu0
  %v1620 = vadd.f32 %v1591, %v1619
  %v1621 = vpop.f32.mrf.mxu0
  %v1622 = vadd.f32 %v1593, %v1621
  %1623 = vmatmul.bf16.gmra.mxu0 %v1544
  %v1624 = vpop.f32.mrf.mxu0
  %v1625 = vadd.f32 %v1596, %v1624
  %v1626 = vpop.f32.mrf.mxu0
  %v1627 = vadd.f32 %v1598, %v1626
  %1628 = vmatmul.bf16.gmra.mxu0 %v1547
  %v1629 = vpop.f32.mrf.mxu0
  %v1630 = vadd.f32 %v1601, %v1629
  %v1631 = vpop.f32.mrf.mxu0
  %v1632 = vadd.f32 %v1603, %v1631
  %1633 = vmatmul.bf16.gmra.mxu0 %v1550
  %v1634 = vpop.f32.mrf.mxu0
  %v1635 = vadd.f32 %v1606, %v1634
  %v1636 = vpop.f32.mrf.mxu0
  %v1637 = vadd.f32 %v1608, %v1636
  %1638 = vdwg.mxu0
  %1639 = vmatpush.bf16.msra.mxu0 %v1424
  %1640 = vmatpush.bf16.msra.mxu0 %v1420
  %1641 = vmatpush.bf16.msra.mxu0 %v1416
  %1642 = vmatpush.bf16.msra.mxu0 %v1412
  %1643 = vmatpush.bf16.msra.mxu0 %v1408
  %1644 = vmatpush.bf16.msra.mxu0 %v1404
  %1645 = vmatpush.bf16.msra.mxu0 %v1400
  %1646 = vmatpush.bf16.msra.mxu0 %v1396
  %1647 = vmatmul.bf16.gmra.mxu0 %v1159
  %v1648 = vpop.f32.mrf.mxu0
  %v1649 = vadd.f32 %v1082, %v1648
  %v1650 = vpop.f32.mrf.mxu0
  %v1651 = vadd.f32 %v1087, %v1650
  %1652 = vmatmul.bf16.gmra.mxu0 %v1162
  %v1653 = vpop.f32.mrf.mxu0
  %v1654 = vadd.f32 %v1092, %v1653
  %v1655 = vpop.f32.mrf.mxu0
  %v1656 = vadd.f32 %v1097, %v1655
  %1657 = vmatmul.bf16.gmra.mxu0 %v1165
  %v1658 = vpop.f32.mrf.mxu0
  %v1659 = vadd.f32 %v1102, %v1658
  %v1660 = vpop.f32.mrf.mxu0
  %v1661 = vadd.f32 %v1107, %v1660
  %1662 = vmatmul.bf16.gmra.mxu0 %v1168
  %v1663 = vpop.f32.mrf.mxu0
  %v1664 = vadd.f32 %v1112, %v1663
  %v1665 = vpop.f32.mrf.mxu0
  %v1666 = vadd.f32 %v1117, %v1665
  %1667 = vdwg.mxu0
  %1668 = vmatpush.bf16.msra.mxu0 %v1456
  %1669 = vmatpush.bf16.msra.mxu0 %v1452
  %1670 = vmatpush.bf16.msra.mxu0 %v1448
  %1671 = vmatpush.bf16.msra.mxu0 %v1444
  %1672 = vmatpush.bf16.msra.mxu0 %v1440
  %1673 = vmatpush.bf16.msra.mxu0 %v1436
  %1674 = vmatpush.bf16.msra.mxu0 %v1432
  %1675 = vmatpush.bf16.msra.mxu0 %v1428
  %1676 = vmatmul.bf16.gmra.mxu0 %v1160
  %v1677 = vpop.f32.mrf.mxu0
  %v1678 = vadd.f32 %v1649, %v1677
  %v1679 = vpop.f32.mrf.mxu0
  %v1680 = vadd.f32 %v1651, %v1679
  %1681 = vmatmul.bf16.gmra.mxu0 %v1163
  %v1682 = vpop.f32.mrf.mxu0
  %v1683 = vadd.f32 %v1654, %v1682
  %v1684 = vpop.f32.mrf.mxu0
  %v1685 = vadd.f32 %v1656, %v1684
  %1686 = vmatmul.bf16.gmra.mxu0 %v1166
  %v1687 = vpop.f32.mrf.mxu0
  %v1688 = vadd.f32 %v1659, %v1687
  %v1689 = vpop.f32.mrf.mxu0
  %v1690 = vadd.f32 %v1661, %v1689
  %1691 = vmatmul.bf16.gmra.mxu0 %v1169
  %v1692 = vpop.f32.mrf.mxu0
  %v1693 = vadd.f32 %v1664, %v1692
  %v1694 = vpop.f32.mrf.mxu0
  %v1695 = vadd.f32 %v1666, %v1694
  %1696 = vdwg.mxu0
  %1697 = vmatpush.bf16.msra.mxu0 0
  %1698 = vmatpush.bf16.msra.mxu0 0
  %1699 = vmatpush.bf16.msra.mxu0 0
  %1700 = vmatpush.bf16.msra.mxu0 0
  %1701 = vmatpush.bf16.msra.mxu0 0
  %1702 = vmatpush.bf16.msra.mxu0 0
  %1703 = vmatpush.bf16.msra.mxu0 %v1464
  %1704 = vmatpush.bf16.msra.mxu0 %v1460
  %1705 = vmatmul.bf16.gmra.mxu0 %v1541
  %v1706 = vpop.f32.mrf.mxu0
  %v1707 = vadd.f32 %v1678, %v1706
  %v1708 = vpop.f32.mrf.mxu0
  %v1709 = vadd.f32 %v1680, %v1708
  %1710 = vmatmul.bf16.gmra.mxu0 %v1544
  %v1711 = vpop.f32.mrf.mxu0
  %v1712 = vadd.f32 %v1683, %v1711
  %v1713 = vpop.f32.mrf.mxu0
  %v1714 = vadd.f32 %v1685, %v1713
  %1715 = vmatmul.bf16.gmra.mxu0 %v1547
  %v1716 = vpop.f32.mrf.mxu0
  %v1717 = vadd.f32 %v1688, %v1716
  %v1718 = vpop.f32.mrf.mxu0
  %v1719 = vadd.f32 %v1690, %v1718
  %1720 = vmatmul.bf16.gmra.mxu0 %v1550
  %v1721 = vpop.f32.mrf.mxu0
  %v1722 = vadd.f32 %v1693, %v1721
  %v1723 = vpop.f32.mrf.mxu0
  %v1724 = vadd.f32 %v1695, %v1723
  %1725 = vdwg.mxu0
  %1726 = vmatpush.bf16.msra.mxu0 %v1425
  %1727 = vmatpush.bf16.msra.mxu0 %v1421
  %1728 = vmatpush.bf16.msra.mxu0 %v1417
  %1729 = vmatpush.bf16.msra.mxu0 %v1413
  %1730 = vmatpush.bf16.msra.mxu0 %v1409
  %1731 = vmatpush.bf16.msra.mxu0 %v1405
  %1732 = vmatpush.bf16.msra.mxu0 %v1401
  %1733 = vmatpush.bf16.msra.mxu0 %v1397
  %1734 = vmatmul.bf16.gmra.mxu0 %v1159
  %v1735 = vpop.f32.mrf.mxu0
  %v1736 = vadd.f32 %v1082, %v1735
  %v1737 = vpop.f32.mrf.mxu0
  %v1738 = vadd.f32 %v1087, %v1737
  %1739 = vmatmul.bf16.gmra.mxu0 %v1162
  %v1740 = vpop.f32.mrf.mxu0
  %v1741 = vadd.f32 %v1092, %v1740
  %v1742 = vpop.f32.mrf.mxu0
  %v1743 = vadd.f32 %v1097, %v1742
  %1744 = vmatmul.bf16.gmra.mxu0 %v1165
  %v1745 = vpop.f32.mrf.mxu0
  %v1746 = vadd.f32 %v1102, %v1745
  %v1747 = vpop.f32.mrf.mxu0
  %v1748 = vadd.f32 %v1107, %v1747
  %1749 = vmatmul.bf16.gmra.mxu0 %v1168
  %v1750 = vpop.f32.mrf.mxu0
  %v1751 = vadd.f32 %v1112, %v1750
  %v1752 = vpop.f32.mrf.mxu0
  %v1753 = vadd.f32 %v1117, %v1752
  %1754 = vdwg.mxu0
  %1755 = vmatpush.bf16.msra.mxu0 %v1457
  %1756 = vmatpush.bf16.msra.mxu0 %v1453
  %1757 = vmatpush.bf16.msra.mxu0 %v1449
  %1758 = vmatpush.bf16.msra.mxu0 %v1445
  %1759 = vmatpush.bf16.msra.mxu0 %v1441
  %1760 = vmatpush.bf16.msra.mxu0 %v1437
  %1761 = vmatpush.bf16.msra.mxu0 %v1433
  %1762 = vmatpush.bf16.msra.mxu0 %v1429
  %1763 = vmatmul.bf16.gmra.mxu0 %v1160
  %v1764 = vpop.f32.mrf.mxu0
  %v1765 = vadd.f32 %v1736, %v1764
  %v1766 = vpop.f32.mrf.mxu0
  %v1767 = vadd.f32 %v1738, %v1766
  %1768 = vmatmul.bf16.gmra.mxu0 %v1163
  %v1769 = vpop.f32.mrf.mxu0
  %v1770 = vadd.f32 %v1741, %v1769
  %v1771 = vpop.f32.mrf.mxu0
  %v1772 = vadd.f32 %v1743, %v1771
  %1773 = vmatmul.bf16.gmra.mxu0 %v1166
  %v1774 = vpop.f32.mrf.mxu0
  %v1775 = vadd.f32 %v1746, %v1774
  %v1776 = vpop.f32.mrf.mxu0
  %v1777 = vadd.f32 %v1748, %v1776
  %1778 = vmatmul.bf16.gmra.mxu0 %v1169
  %v1779 = vpop.f32.mrf.mxu0
  %v1780 = vadd.f32 %v1751, %v1779
  %v1781 = vpop.f32.mrf.mxu0
  %v1782 = vadd.f32 %v1753, %v1781
  %1783 = vdwg.mxu0
  %1784 = vmatpush.bf16.msra.mxu0 0
  %1785 = vmatpush.bf16.msra.mxu0 0
  %1786 = vmatpush.bf16.msra.mxu0 0
  %1787 = vmatpush.bf16.msra.mxu0 0
  %1788 = vmatpush.bf16.msra.mxu0 0
  %1789 = vmatpush.bf16.msra.mxu0 0
  %1790 = vmatpush.bf16.msra.mxu0 %v1465
  %1791 = vmatpush.bf16.msra.mxu0 %v1461
  %1792 = vmatmul.bf16.gmra.mxu0 %v1541
  %v1793 = vpop.f32.mrf.mxu0
  %v1794 = vadd.f32 %v1765, %v1793
  %v1795 = vpop.f32.mrf.mxu0
  %v1796 = vadd.f32 %v1767, %v1795
  %1797 = vmatmul.bf16.gmra.mxu0 %v1544
  %v1798 = vpop.f32.mrf.mxu0
  %v1799 = vadd.f32 %v1770, %v1798
  %v1800 = vpop.f32.mrf.mxu0
  %v1801 = vadd.f32 %v1772, %v1800
  %1802 = vmatmul.bf16.gmra.mxu0 %v1547
  %v1803 = vpop.f32.mrf.mxu0
  %v1804 = vadd.f32 %v1775, %v1803
  %v1805 = vpop.f32.mrf.mxu0
  %v1806 = vadd.f32 %v1777, %v1805
  %1807 = vmatmul.bf16.gmra.mxu0 %v1550
  %v1808 = vpop.f32.mrf.mxu0
  %v1809 = vadd.f32 %v1780, %v1808
  %v1810 = vpop.f32.mrf.mxu0
  %v1811 = vadd.f32 %v1782, %v1810
  %1812 = vdwg.mxu0
  %1813 = vmatpush.bf16.msra.mxu0 %v1426
  %1814 = vmatpush.bf16.msra.mxu0 %v1422
  %1815 = vmatpush.bf16.msra.mxu0 %v1418
  %1816 = vmatpush.bf16.msra.mxu0 %v1414
  %1817 = vmatpush.bf16.msra.mxu0 %v1410
  %1818 = vmatpush.bf16.msra.mxu0 %v1406
  %1819 = vmatpush.bf16.msra.mxu0 %v1402
  %1820 = vmatpush.bf16.msra.mxu0 %v1398
  %1821 = vmatmul.bf16.gmra.mxu0 %v1159
  %v1822 = vpop.f32.mrf.mxu0
  %v1823 = vadd.f32 %v1082, %v1822
  %v1824 = vpop.f32.mrf.mxu0
  %v1825 = vadd.f32 %v1087, %v1824
  %1826 = vmatmul.bf16.gmra.mxu0 %v1162
  %v1827 = vpop.f32.mrf.mxu0
  %v1828 = vadd.f32 %v1092, %v1827
  %v1829 = vpop.f32.mrf.mxu0
  %v1830 = vadd.f32 %v1097, %v1829
  %1831 = vmatmul.bf16.gmra.mxu0 %v1165
  %v1832 = vpop.f32.mrf.mxu0
  %v1833 = vadd.f32 %v1102, %v1832
  %v1834 = vpop.f32.mrf.mxu0
  %v1835 = vadd.f32 %v1107, %v1834
  %1836 = vmatmul.bf16.gmra.mxu0 %v1168
  %v1837 = vpop.f32.mrf.mxu0
  %v1838 = vadd.f32 %v1112, %v1837
  %v1839 = vpop.f32.mrf.mxu0
  %v1840 = vadd.f32 %v1117, %v1839
  %1841 = vdwg.mxu0
  %1842 = vmatpush.bf16.msra.mxu0 %v1458
  %1843 = vmatpush.bf16.msra.mxu0 %v1454
  %1844 = vmatpush.bf16.msra.mxu0 %v1450
  %1845 = vmatpush.bf16.msra.mxu0 %v1446
  %1846 = vmatpush.bf16.msra.mxu0 %v1442
  %1847 = vmatpush.bf16.msra.mxu0 %v1438
  %1848 = vmatpush.bf16.msra.mxu0 %v1434
  %1849 = vmatpush.bf16.msra.mxu0 %v1430
  %1850 = vmatmul.bf16.gmra.mxu0 %v1160
  %v1851 = vpop.f32.mrf.mxu0
  %v1852 = vadd.f32 %v1823, %v1851
  %v1853 = vpop.f32.mrf.mxu0
  %v1854 = vadd.f32 %v1825, %v1853
  %1855 = vmatmul.bf16.gmra.mxu0 %v1163
  %v1856 = vpop.f32.mrf.mxu0
  %v1857 = vadd.f32 %v1828, %v1856
  %v1858 = vpop.f32.mrf.mxu0
  %v1859 = vadd.f32 %v1830, %v1858
  %1860 = vmatmul.bf16.gmra.mxu0 %v1166
  %v1861 = vpop.f32.mrf.mxu0
  %v1862 = vadd.f32 %v1833, %v1861
  %v1863 = vpop.f32.mrf.mxu0
  %v1864 = vadd.f32 %v1835, %v1863
  %1865 = vmatmul.bf16.gmra.mxu0 %v1169
  %v1866 = vpop.f32.mrf.mxu0
  %v1867 = vadd.f32 %v1838, %v1866
  %v1868 = vpop.f32.mrf.mxu0
  %v1869 = vadd.f32 %v1840, %v1868
  %1870 = vdwg.mxu0
  %1871 = vmatpush.bf16.msra.mxu0 0
  %1872 = vmatpush.bf16.msra.mxu0 0
  %1873 = vmatpush.bf16.msra.mxu0 0
  %1874 = vmatpush.bf16.msra.mxu0 0
  %1875 = vmatpush.bf16.msra.mxu0 0
  %1876 = vmatpush.bf16.msra.mxu0 0
  %1877 = vmatpush.bf16.msra.mxu0 %v1466
  %1878 = vmatpush.bf16.msra.mxu0 %v1462
  %1879 = vmatmul.bf16.gmra.mxu0 %v1541
  %v1880 = vpop.f32.mrf.mxu0
  %v1881 = vadd.f32 %v1852, %v1880
  %v1882 = vpop.f32.mrf.mxu0
  %v1883 = vadd.f32 %v1854, %v1882
  %1884 = vmatmul.bf16.gmra.mxu0 %v1544
  %v1885 = vpop.f32.mrf.mxu0
  %v1886 = vadd.f32 %v1857, %v1885
  %v1887 = vpop.f32.mrf.mxu0
  %v1888 = vadd.f32 %v1859, %v1887
  %1889 = vmatmul.bf16.gmra.mxu0 %v1547
  %v1890 = vpop.f32.mrf.mxu0
  %v1891 = vadd.f32 %v1862, %v1890
  %v1892 = vpop.f32.mrf.mxu0
  %v1893 = vadd.f32 %v1864, %v1892
  %1894 = vmatmul.bf16.gmra.mxu0 %v1550
  %v1895 = vpop.f32.mrf.mxu0
  %v1896 = vadd.f32 %v1867, %v1895
  %v1897 = vpop.f32.mrf.mxu0
  %v1898 = vadd.f32 %v1869, %v1897
  %1899 = vdwg.mxu0
  %v1900 = vmax.f32 %v1620, 0.0
  %v1901 = vmax.f32 %v1707, 0.0
  %v1902 = vmax.f32 %v1794, 0.0
  %v1903 = vmax.f32 %v1881, 0.0
  %v1904 = vmax.f32 %v1622, 0.0
  %v1905 = vmax.f32 %v1709, 0.0
  %v1906 = vmax.f32 %v1796, 0.0
  %v1907 = vmax.f32 %v1883, 0.0
  %v1908 = vmax.f32 %v1625, 0.0
  %v1909 = vmax.f32 %v1712, 0.0
  %v1910 = vmax.f32 %v1799, 0.0
  %v1911 = vmax.f32 %v1886, 0.0
  %v1912 = vmax.f32 %v1627, 0.0
  %v1913 = vmax.f32 %v1714, 0.0
  %v1914 = vmax.f32 %v1801, 0.0
  %v1915 = vmax.f32 %v1888, 0.0
  %v1916 = vmax.f32 %v1630, 0.0
  %v1917 = vmax.f32 %v1717, 0.0
  %v1918 = vmax.f32 %v1804, 0.0
  %v1919 = vmax.f32 %v1891, 0.0
  %v1920 = vmax.f32 %v1632, 0.0
  %v1921 = vmax.f32 %v1719, 0.0
  %v1922 = vmax.f32 %v1806, 0.0
  %v1923 = vmax.f32 %v1893, 0.0
  %v1924 = vmax.f32 %v1635, 0.0
  %v1925 = vmax.f32 %v1722, 0.0
  %v1926 = vmax.f32 %v1809, 0.0
  %v1927 = vmax.f32 %v1896, 0.0
  %v1928 = vmax.f32 %v1637, 0.0
  %v1929 = vmax.f32 %v1724, 0.0
  %v1930 = vmax.f32 %v1811, 0.0
  %v1931 = vmax.f32 %v1898, 0.0
  %v1932 = vld [vmem:[%s6] sm:$0x3]
  %vm1933 = vcmask 523264
  %v1935 = vsel %vm1933, %v1932, 0
  %1937 = vmatpush.msra.mxu0 0.0
  %1938 = vmatpush.msra.mxu0 0.0
  %1939 = vmatpush.msra.mxu0 0.0
  %1940 = vmatpush.msra.mxu0 0.0
  %1941 = vmatpush.msra.mxu0 0.0
  %1942 = vmatpush.msra.mxu0 0.0
  %1943 = vmatpush.msra.mxu0 0.0
  %1944 = vmatpush.msra.mxu0 0.0
  %1945 = vmatpush.msra.mxu0 %v1928
  %1946 = vmatpush.msra.mxu0 %v1924
  %1947 = vmatpush.msra.mxu0 %v1920
  %1948 = vmatpush.msra.mxu0 %v1916
  %1949 = vmatpush.msra.mxu0 %v1912
  %1950 = vmatpush.msra.mxu0 %v1908
  %1951 = vmatpush.msra.mxu0 %v1904
  %1952 = vmatpush.msra.mxu0 %v1900
  %1953 = vmatmul.f32.gmra.mxu0 %v1935
  %v1954 = vpop.f32.mrf.mxu0
  %v1955 = vadd.f32 0.0, %v1954
  %1956 = vdwg.mxu0
  %1957 = vmatpush.msra.mxu0 0.0
  %1958 = vmatpush.msra.mxu0 0.0
  %1959 = vmatpush.msra.mxu0 0.0
  %1960 = vmatpush.msra.mxu0 0.0
  %1961 = vmatpush.msra.mxu0 0.0
  %1962 = vmatpush.msra.mxu0 0.0
  %1963 = vmatpush.msra.mxu0 0.0
  %1964 = vmatpush.msra.mxu0 0.0
  %1965 = vmatpush.msra.mxu0 %v1929
  %1966 = vmatpush.msra.mxu0 %v1925
  %1967 = vmatpush.msra.mxu0 %v1921
  %1968 = vmatpush.msra.mxu0 %v1917
  %1969 = vmatpush.msra.mxu0 %v1913
  %1970 = vmatpush.msra.mxu0 %v1909
  %1971 = vmatpush.msra.mxu0 %v1905
  %1972 = vmatpush.msra.mxu0 %v1901
  %1973 = vmatmul.f32.gmra.mxu0 %v1935
  %v1974 = vpop.f32.mrf.mxu0
  %v1975 = vadd.f32 0.0, %v1974
  %1976 = vdwg.mxu0
  %1977 = vmatpush.msra.mxu0 0.0
  %1978 = vmatpush.msra.mxu0 0.0
  %1979 = vmatpush.msra.mxu0 0.0
  %1980 = vmatpush.msra.mxu0 0.0
  %1981 = vmatpush.msra.mxu0 0.0
  %1982 = vmatpush.msra.mxu0 0.0
  %1983 = vmatpush.msra.mxu0 0.0
  %1984 = vmatpush.msra.mxu0 0.0
  %1985 = vmatpush.msra.mxu0 %v1930
  %1986 = vmatpush.msra.mxu0 %v1926
  %1987 = vmatpush.msra.mxu0 %v1922
  %1988 = vmatpush.msra.mxu0 %v1918
  %1989 = vmatpush.msra.mxu0 %v1914
  %1990 = vmatpush.msra.mxu0 %v1910
  %1991 = vmatpush.msra.mxu0 %v1906
  %1992 = vmatpush.msra.mxu0 %v1902
  %1993 = vmatmul.f32.gmra.mxu0 %v1935
  %v1994 = vpop.f32.mrf.mxu0
  %v1995 = vadd.f32 0.0, %v1994
  %1996 = vdwg.mxu0
  %1997 = vmatpush.msra.mxu0 0.0
  %1998 = vmatpush.msra.mxu0 0.0
  %1999 = vmatpush.msra.mxu0 0.0
  %2000 = vmatpush.msra.mxu0 0.0
  %2001 = vmatpush.msra.mxu0 0.0
  %2002 = vmatpush.msra.mxu0 0.0
  %2003 = vmatpush.msra.mxu0 0.0
  %2004 = vmatpush.msra.mxu0 0.0
  %2005 = vmatpush.msra.mxu0 %v1931
  %2006 = vmatpush.msra.mxu0 %v1927
  %2007 = vmatpush.msra.mxu0 %v1923
  %2008 = vmatpush.msra.mxu0 %v1919
  %2009 = vmatpush.msra.mxu0 %v1915
  %2010 = vmatpush.msra.mxu0 %v1911
  %2011 = vmatpush.msra.mxu0 %v1907
  %2012 = vmatpush.msra.mxu0 %v1903
  %2013 = vmatmul.f32.gmra.mxu0 %v1935
  %v2014 = vpop.f32.mrf.mxu0
  %v2015 = vadd.f32 0.0, %v2014
  %2016 = vdwg.mxu0
  %vm2017 = vcmask 1041408
  %v2018 = vsel %vm2017, %v1955, 0.0
  %v2019 = vsel %vm2017, %v1975, 0.0
  %v2020 = vadd.f32 %v2018, %v2019
  %2021 = vadd.xlane.f32.xlu0 %v2020
  %v2022 = vpop.xlane.xlu0 %2021
  %v2023 = vsel %vm2017, %v1995, 0.0
  %v2024 = vsel %vm2017, %v2015, 0.0
  %v2025 = vadd.f32 %v2023, %v2024
  %2026 = vadd.xlane.f32.xlu0 %v2025
  %v2027 = vpop.xlane.xlu0 %2026
  %vm2028 = vcmask 7168
  %v2029 = vsel %vm2028, %v2022, %v2027
  %v2030 = vmul.f32 %v2029, 0.00390625
  %v2031 = vld [vmem:[%s7] sm:$0x3]
  %2033 = vset.pattern.permute.xlu0 0
  %2034 = vperm.xlu0 %2033, %v2031
  %v2035 = vpop.permute.xlu0 %2034
  %v2037 = vadd.f32 %v2030, %v2035
  %vm2038 = vcmask 9216
  %2039 = vst.msk [vmem:[%s8] sm:$0x3] %vm2038, %v2037
  // Predicated region
  $region34: #{_simple_cnn_forward_impl.1} parent=0 // pred_check
    _
  $region35: #{_simple_cnn_forward_impl.1} parent=0 // pred_check_branch
    %2041 = sbr.rel (0) target = $region37
  $region36: #{_simple_cnn_forward_impl.1} parent=0 // pred_region
    _
  $region37: #{_simple_cnn_forward_impl.1} parent=0 // pred_fallthru
    _
  // Predicated region
  $region38: #{_simple_cnn_forward_impl.1} parent=0 // pred_check
    _
  $region39: #{_simple_cnn_forward_impl.1} parent=0 // pred_check_branch
    %2043 = sbr.rel (0) target = $region41
  $region40: #{_simple_cnn_forward_impl.1} parent=0 // pred_region
    _
  $region41: #{_simple_cnn_forward_impl.1} parent=0 // pred_fallthru
    _

</llo_original>
